<compile_context>
chip_gen: v6e
topology: v6e:2x2x1
jax: 0.10.0
libtpu: 0.0.40
codegen_flags: <defaults>
</compile_context>

<pallas_src>
import functools

import jax
import jax.numpy as jnp
from jax import lax
from jax.experimental import pallas as pl
from jax.experimental.pallas import tpu as pltpu


# 3x3 taps in the same row-major (ki, kj) order as reshape(-1) of a conv kernel.
_TAPS = tuple((di, dj) for di in (-1, 0, 1) for dj in (-1, 0, 1))


# --------------------------------- kernel ------------------------------------

def _frnet_kernel(x_ref, wbig_ref, pack_ref, tapm_ref,
                  out_ref, cw_ref, stack_ref, *, c, h, w, pack_offs):
    hw = h * w
    c2 = 2 * c
    o_wpo, o_wmout, o_negm, o_temp, o_conv = pack_offs

    x = x_ref[...]                                 # (2C, HW): rows [0,C)=dec, [C,2C)=seg
    x_dec, x_seg = x[:c], x[c:]
    tapm = tapm_ref[...]                           # (9, HW)

    # Build the 3x3 shifted-tap stack for BOTH inputs directly in VMEM scratch:
    #   rows [t*C, (t+1)*C)          = tap t of x_dec
    #   rows [9C + t*C, 9C+(t+1)*C)  = tap t of x_seg
    for t, (di, dj) in enumerate(_TAPS):
        off = di * w + dj
        xt = x if off == 0 else pltpu.roll(x, shift=(-off) % hw, axis=1)
        if off != 0:
            xt = xt * tapm[t:t + 1, :]             # zero-padding mask (sublane bcast)
        stack_ref[t * c:(t + 1) * c, :] = xt[:c]
        stack_ref[9 * c + t * c:9 * c + (t + 1) * c, :] = xt[c:]

    # One block-diagonal matmul = qkv + qkv_dwconv + project_in + dwconv of BOTH
    # IEUs: (14C, 18C) @ (18C, HW).
    big = jnp.dot(wbig_ref[...], stack_ref[...],
                  preferred_element_type=jnp.float32)              # (14C, HW)
    q, k, v = big[0:c2], big[c2:2 * c2], big[2 * c2:3 * c2]        # (2C, HW) each
    x1, x2 = big[3 * c2:5 * c2], big[5 * c2:7 * c2]                # (4C, HW) each

    pack = pack_ref[...]                            # (2C, packed small weights)
    wpo = pack[:, o_wpo:o_wpo + c2]                 # block-diag project_out   (2C, 2C)
    wmout = pack[:, o_wmout:o_wmout + 4 * c]        # block-diag mlp proj_out  (2C, 4C)
    negm = pack[:, o_negm:o_negm + c2]              # (IEU, head) block mask   (2C, 2C)
    temp = pack[:, o_temp:o_temp + 1]               # per-channel temperature  (2C, 1)
    convc = pack[:, o_conv:o_conv + 1]              # rows[:C]=conv_w, row[C]=conv_b

    # ------- fused restormer channel attention for both IEUs -------
    def _l2n(t):                                    # matches F.normalize(eps=1e-12)
        ss = jnp.sum(t * t, axis=-1, keepdims=True)
        return t * lax.rsqrt(jnp.maximum(ss, 1e-24))

    qn = _l2n(q) * temp                             # temperature folded into q rows
    kn = _l2n(k)
    # q @ k^T without an explicit transpose (contract the lane axis of both).
    scores = lax.dot_general(qn, kn, (((1,), (1,)), ((), ())),
                             preferred_element_type=jnp.float32)   # (2C, 2C)
    scores = scores + negm                          # heads / IEUs never mix
    scores = scores - jnp.max(scores, axis=-1, keepdims=True)
    p = jnp.exp(scores)
    p = p * pl.reciprocal(jnp.sum(p, axis=-1, keepdims=True), approx=True)
    ctx = jnp.dot(p, v, preferred_element_type=jnp.float32)        # (2C, HW)
    att = jnp.dot(wpo, ctx, preferred_element_type=jnp.float32)    # (2C, HW)

    # ------- fused gated-dwconv Mlp for both IEUs -------
    # TODO(synk): PyTorch F.gelu defaults to the exact erf form; tanh approx used here
    # (and in the in-script reference) since erf has no reliable Mosaic lowering.
    y = jax.nn.gelu(x1, approximate=True) * x2                     # (4C, HW)
    mlp = jnp.dot(wmout, y, preferred_element_type=jnp.float32)    # (2C, HW)

    ieu = jnp.maximum(mlp, 0.0) * att   # rows [0,C)=IEU_G(x_dec), [C,2C)=IEU_W(x_seg)
    com = ieu[:c]
    wmat = jax.nn.sigmoid(ieu[c:])
    cw_ref[:c, :] = com.astype(cw_ref.dtype)
    cw_ref[c:, :] = wmat.astype(cw_ref.dtype)

    # ------- CSGate + final 1x1 conv (bias folded into the packed conv column) ----
    x_comb = x_seg * wmat + com * (1.0 - wmat) + x_dec             # (C, HW)
    yout = jnp.sum(convc[:c] * x_comb, axis=0, keepdims=True) + convc[c:c + 1]
    out_ref[...] = yout.astype(out_ref.dtype)


# ----------------------------- host-side packing ------------------------------

def _pack_ieu(p, c, num_heads):
    """Fold (1x1 conv -> 3x3 dw/grouped conv) pairs into one (7C, 9C) tap weight
    plus the small tails (project_out, per-channel temperature, mlp project_out)."""
    qkv_w = p["att_qkv_w"].reshape(3 * c, c)
    att_dw9 = p["att_dw_w"].reshape(3 * c, 9)
    att_blocks = [qkv_w * att_dw9[:, k:k + 1] for k in range(9)]

    hid2 = 4 * c
    in_w = p["mlp_in_w"].reshape(hid2, c)
    # grouped conv (groups = 2C, 2 channels/group): output channel o reads
    # project_in channels 2*(o//2) and 2*(o//2)+1.
    in_even = jnp.repeat(in_w[0::2], 2, axis=0)            # (4C, C)
    in_odd = jnp.repeat(in_w[1::2], 2, axis=0)             # (4C, C)
    mdw0 = p["mlp_dw_w"][:, 0].reshape(hid2, 9)
    mdw1 = p["mlp_dw_w"][:, 1].reshape(hid2, 9)
    mlp_blocks = [mdw0[:, k:k + 1] * in_even + mdw1[:, k:k + 1] * in_odd
                  for k in range(9)]

    wbig = jnp.concatenate(
        [jnp.concatenate([att_blocks[k], mlp_blocks[k]], axis=0) for k in range(9)],
        axis=1)                                            # (7C, 9C): rows q,k,v,x1,x2

    temp = jnp.repeat(p["temperature"], c // num_heads).reshape(c, 1)
    wpo = p["att_proj_w"].reshape(c, c)
    wmout = p["mlp_out_w"].reshape(c, 2 * c)
    return wbig, wpo, temp, wmout


def _block_diag(a, b):
    za = jnp.zeros((a.shape[0], b.shape[1]), a.dtype)
    zb = jnp.zeros((b.shape[0], a.shape[1]), b.dtype)
    return jnp.concatenate([jnp.concatenate([a, za], axis=1),
                            jnp.concatenate([zb, b], axis=1)], axis=0)


def _pad_to_128(a):
    pad = (-a.shape[1]) % 128
    return jnp.pad(a, ((0, 0), (0, pad))) if pad else a


def _pack_frnet(params, c, num_heads):
    wbig_g, wpo_g, temp_g, wmout_g = _pack_ieu(params["ieu_g"], c, num_heads)
    wbig_w, wpo_w, temp_w, wmout_w = _pack_ieu(params["ieu_w"], c, num_heads)

    # Block-diagonal fusion of the two IEUs; rows ordered so that q/k/v/x1/x2 of
    # the fused matmul output are contiguous 2C / 4C slabs ([G rows; W rows]).
    wbig_f = jnp.concatenate([
        _block_diag(wbig_g[0:c], wbig_w[0:c]),                   # q
        _block_diag(wbig_g[c:2 * c], wbig_w[c:2 * c]),           # k
        _block_diag(wbig_g[2 * c:3 * c], wbig_w[2 * c:3 * c]),   # v
        _block_diag(wbig_g[3 * c:5 * c], wbig_w[3 * c:5 * c]),   # mlp x1
        _block_diag(wbig_g[5 * c:7 * c], wbig_w[5 * c:7 * c]),   # mlp x2
    ], axis=0)                                                   # (14C, 18C)

    wpo_f = _block_diag(wpo_g, wpo_w)                            # (2C, 2C)
    wmout_f = _block_diag(wmout_g, wmout_w)                      # (2C, 4C)
    temp_f = jnp.concatenate([temp_g, temp_w], axis=0)           # (2C, 1)

    # Additive score mask: finite only within the same (IEU, head) block.
    idx = jnp.arange(2 * c)
    grp = (idx // c) * num_heads + (idx % c) // (c // num_heads)
    negm = jnp.where(grp[:, None] == grp[None, :], 0.0, -1e30).astype(jnp.float32)

    convc = jnp.zeros((2 * c, 1), jnp.float32)
    convc = convc.at[:c, 0].set(params["conv_w"].reshape(c))
    convc = convc.at[c, 0].set(params["conv_b"].reshape(()))

    # Consolidate all small weights into ONE lane-aligned packed operand.
    blocks = [wpo_f, wmout_f, negm, temp_f, convc]
    offs, cols, off = [], [], 0
    for blk in blocks:
        offs.append(off)
        padded = _pad_to_128(blk)
        cols.append(padded)
        off += padded.shape[1]
    pack = jnp.concatenate(cols, axis=1)                         # (2C, 5*128) here
    return wbig_f, pack, tuple(offs)


def _make_tap_mask(h, w):
    """(9, H*W) 0/1 mask implementing the 3x3 zero padding for the shifted taps."""
    row = jnp.arange(h * w) // w
    col = jnp.arange(h * w) % w
    masks = []
    for di, dj in _TAPS:
        valid = ((row + di >= 0) & (row + di < h) &
                 (col + dj >= 0) & (col + dj < w))
        masks.append(valid.astype(jnp.float32))
    return jnp.stack(masks, axis=0)


def frnet_forward(x_dec, x_seg, params, num_heads):
    """Pallas FRNet forward (weight_type='bit' for both IEUs, the module default).
    Returns (x_out, x_dec, x_seg, com_feature, weight_matrix)."""
    # TODO(synk): the IEU weight_type='vector' reduction branch is not implemented
    # (FRNet constructs both IEUs with the default 'bit' type).
    b, c, h, w = x_dec.shape
    hw = h * w
    assert x_seg.shape == x_dec.shape and c % num_heads == 0

    wbig_f, pack, pack_offs = _pack_frnet(params, c, num_heads)
    tap_mask = _make_tap_mask(h, w)
    x_in = jnp.concatenate([x_dec.reshape(b, c, hw),
                            x_seg.reshape(b, c, hw)], axis=1)    # (B, 2C, HW)

    out, cw = pl.pallas_call(
        functools.partial(_frnet_kernel, c=c, h=h, w=w, pack_offs=pack_offs),
        out_shape=(
            jax.ShapeDtypeStruct((b, 1, hw), x_dec.dtype),       # final conv output
            jax.ShapeDtypeStruct((b, 2 * c, hw), x_dec.dtype),   # [com ; weight_matrix]
        ),
        grid=(b,),
        in_specs=[
            pl.BlockSpec((pl.Squeezed(), 2 * c, hw), lambda i: (i, 0, 0)),
            pl.BlockSpec(wbig_f.shape, lambda i: (0, 0)),
            pl.BlockSpec(pack.shape, lambda i: (0, 0)),
            pl.BlockSpec(tap_mask.shape, lambda i: (0, 0)),
        ],
        out_specs=(
            pl.BlockSpec((pl.Squeezed(), 1, hw), lambda i: (i, 0, 0)),
            pl.BlockSpec((pl.Squeezed(), 2 * c, hw), lambda i: (i, 0, 0)),
        ),
        scratch_shapes=[pltpu.VMEM((18 * c, hw), jnp.float32)],
        compiler_params=pltpu.CompilerParams(
            dimension_semantics=("parallel",),
        ),
    )(x_in, wbig_f, pack, tap_mask)

    com = cw[:, :c].reshape(b, c, h, w)
    wmat = cw[:, c:].reshape(b, c, h, w)
    return out.reshape(b, 1, h, w), x_dec, x_seg, com, wmat


# --------------------------- parameter construction ---------------------------

def _uniform(key, shape, fan_in):
    bound = 1.0 / (fan_in ** 0.5)
    return jax.random.uniform(key, shape, jnp.float32, -bound, bound)


def init_ieu_params(key, c, num_heads):
    ks = jax.random.split(key, 7)
    hid = 2 * c
    return {
        "att_qkv_w": _uniform(ks[0], (3 * c, c, 1, 1), c),      # Conv2d(C,3C,1)
        "att_dw_w": _uniform(ks[1], (3 * c, 1, 3, 3), 9),       # depthwise 3x3
        "att_proj_w": _uniform(ks[2], (c, c, 1, 1), c),         # Conv2d(C,C,1)
        "temperature": jax.random.uniform(ks[3], (num_heads,), jnp.float32, 0.5, 1.5),
        "mlp_in_w": _uniform(ks[4], (2 * hid, c, 1, 1), c),     # Conv2d(C,4C,1)
        "mlp_dw_w": _uniform(ks[5], (2 * hid, 2, 3, 3), 18),    # groups=2C conv
        "mlp_out_w": _uniform(ks[6], (c, hid, 1, 1), hid),      # Conv2d(2C,C,1)
    }


def init_frnet_params(key, c, num_heads):
    kg, kw, kcw, kcb = jax.random.split(key, 4)
    return {
        "ieu_g": init_ieu_params(kg, c, num_heads),
        "ieu_w": init_ieu_params(kw, c, num_heads),
        "conv_w": _uniform(kcw, (1, c, 1, 1), c),               # Conv2d(C,1,1)
        "conv_b": _uniform(kcb, (1,), c),
    }


# ------------------------------ plain-JAX reference ----------------------------

def _conv2d_ref(x, w, groups=1, bias=None):
    pad = w.shape[-1] // 2
    out = lax.conv_general_dilated(
        x, w, window_strides=(1, 1), padding=[(pad, pad), (pad, pad)],
        dimension_numbers=("NCHW", "OIHW", "NCHW"),
        feature_group_count=groups, precision=lax.Precision.HIGHEST)
    if bias is not None:
        out = out + bias.reshape(1, -1, 1, 1)
    return out


def _attention_ref(x, p, num_heads):
    b, c, h, w = x.shape
    qkv = _conv2d_ref(_conv2d_ref(x, p["att_qkv_w"]), p["att_dw_w"], groups=3 * c)
    q, k, v = jnp.split(qkv, 3, axis=1)
    rs = lambda t: t.reshape(b, num_heads, c // num_heads, h * w)
    q, k, v = rs(q), rs(k), rs(v)
    nrm = lambda t: t / jnp.maximum(
        jnp.sqrt(jnp.sum(t * t, axis=-1, keepdims=True)), 1e-12)
    q, k = nrm(q), nrm(k)
    attn = jnp.einsum("bhcd,bhed->bhce", q, k, precision=lax.Precision.HIGHEST)
    attn = attn * p["temperature"].reshape(1, num_heads, 1, 1)
    attn = jax.nn.softmax(attn, axis=-1)
    out = jnp.einsum("bhce,bhed->bhcd", attn, v,
                     precision=lax.Precision.HIGHEST).reshape(b, c, h, w)
    return _conv2d_ref(out, p["att_proj_w"])


def _mlp_ref(x, p):
    c = x.shape[1]
    t = _conv2d_ref(_conv2d_ref(x, p["mlp_in_w"]), p["mlp_dw_w"], groups=2 * c)
    x1, x2 = jnp.split(t, 2, axis=1)
    return _conv2d_ref(jax.nn.gelu(x1, approximate=True) * x2, p["mlp_out_w"])


def _ieu_ref(x, p, num_heads):
    return jax.nn.relu(_mlp_ref(x, p)) * _attention_ref(x, p, num_heads)


def frnet_reference(x_dec, x_seg, params, num_heads):
    com = _ieu_ref(x_dec, params["ieu_g"], num_heads)
    wmat = jax.nn.sigmoid(_ieu_ref(x_seg, params["ieu_w"], num_heads))
    x_out = x_seg * wmat + com * (1.0 - wmat) + x_dec
    x_out = _conv2d_ref(x_out, params["conv_w"], bias=params["conv_b"])
    return x_out, x_dec, x_seg, com, wmat


# ------------------------------------- main ------------------------------------

if __name__ == "__main__":
    B, C, H, W = 2, 8, 16, 16      # batch, in_features (dim), spatial
    NUM_HEADS = 4

    key = jax.random.PRNGKey(0)
    k_dec, k_seg, k_par = jax.random.split(key, 3)
    x_dec = jax.random.normal(k_dec, (B, C, H, W), dtype=jnp.float32)
    x_seg = jax.random.normal(k_seg, (B, C, H, W), dtype=jnp.float32)
    params = init_frnet_params(k_par, C, NUM_HEADS)

    outs = jax.block_until_ready(frnet_forward(x_dec, x_seg, params, NUM_HEADS))
    x_out, _, _, com, wmat = outs

    refs = frnet_reference(x_dec, x_seg, params, NUM_HEADS)
    assert x_out.shape == (B, 1, H, W)
    assert com.shape == (B, C, H, W) and wmat.shape == (B, C, H, W)
    for got, ref in ((x_out, refs[0]), (com, refs[3]), (wmat, refs[4])):
        err = jnp.max(jnp.abs(got - ref))
        assert jnp.allclose(got, ref, atol=1e-3, rtol=1e-3), \
            f"mismatch vs reference (max abs err = {err})"

    print("KERNEL_OK")
</pallas_src>

<mosaic_0001>
module attributes {stable_mosaic.version = 11 : i64} {
  func.func @_frnet_kernel(%arg0: i32, %arg1: memref<1x16x256xf32, #tpu.memory_space<vmem>>, %arg2: memref<112x144xf32, #tpu.memory_space<vmem>>, %arg3: memref<16x640xf32, #tpu.memory_space<vmem>>, %arg4: memref<9x256xf32, #tpu.memory_space<vmem>>, %arg5: memref<1x1x256xf32, #tpu.memory_space<vmem>>, %arg6: memref<1x16x256xf32, #tpu.memory_space<vmem>>, %arg7: memref<144x256xf32, #tpu.memory_space<vmem>>) attributes {dimension_semantics = [#tpu.dimension_semantics<parallel>], iteration_bounds = array<i64: 2>, scalar_prefetch = 0 : i64, scratch_operands = 1 : i64, tpu.core_type = #tpu.core_type<tc>, window_params = [{transform_indices = @transform_0, window_bounds = array<i64: 1, 16, 256>}, {pipeline_mode = #tpu.pipeline_mode<synchronous>, transform_indices = @transform_1, window_bounds = array<i64: 112, 144>}, {pipeline_mode = #tpu.pipeline_mode<synchronous>, transform_indices = @transform_2, window_bounds = array<i64: 16, 640>}, {pipeline_mode = #tpu.pipeline_mode<synchronous>, transform_indices = @transform_3, window_bounds = array<i64: 9, 256>}, {transform_indices = @transform_4, window_bounds = array<i64: 1, 1, 256>}, {transform_indices = @transform_5, window_bounds = array<i64: 1, 16, 256>}]} {
    %c0 = arith.constant 0 : index
    %c0_0 = arith.constant 0 : index
    %c0_1 = arith.constant 0 : index
    %0 = vector.load %arg1[%c0, %c0_0, %c0_1] : memref<1x16x256xf32, #tpu.memory_space<vmem>>, vector<1x16x256xf32>
    %1 = vector.shape_cast %0 : vector<1x16x256xf32> to vector<16x256xf32>
    %2 = vector.extract_strided_slice %1 {offsets = [0, 0], sizes = [8, 256], strides = [1, 1]} : vector<16x256xf32> to vector<8x256xf32>
    %3 = vector.extract_strided_slice %1 {offsets = [8, 0], sizes = [8, 256], strides = [1, 1]} : vector<16x256xf32> to vector<8x256xf32>
    %c0_2 = arith.constant 0 : index
    %c0_3 = arith.constant 0 : index
    %4 = vector.load %arg4[%c0_2, %c0_3] : memref<9x256xf32, #tpu.memory_space<vmem>>, vector<9x256xf32>
    %c17_i32 = arith.constant 17 : i32
    %5 = tpu.dynamic_rotate %1 by %c17_i32 dim 1 : vector<16x256xf32>, i32 -> vector<16x256xf32>
    %6 = vector.extract_strided_slice %4 {offsets = [0, 0], sizes = [1, 256], strides = [1, 1]} : vector<9x256xf32> to vector<1x256xf32>
    %7 = vector.broadcast %6 : vector<1x256xf32> to vector<16x256xf32>
    %8 = arith.mulf %5, %7 : vector<16x256xf32>
    %9 = vector.extract_strided_slice %8 {offsets = [0, 0], sizes = [8, 256], strides = [1, 1]} : vector<16x256xf32> to vector<8x256xf32>
    %c0_4 = arith.constant 0 : index
    %c0_5 = arith.constant 0 : index
    %10 = vector.load %arg7[%c0_4, %c0_5] : memref<144x256xf32, #tpu.memory_space<vmem>>, vector<8x256xf32>
    tpu.vector_store %arg7[%c0_4, %c0_5], %9 {strides = array<i32>} : memref<144x256xf32, #tpu.memory_space<vmem>>, vector<8x256xf32>,
    %11 = vector.extract_strided_slice %8 {offsets = [8, 0], sizes = [8, 256], strides = [1, 1]} : vector<16x256xf32> to vector<8x256xf32>
    %c72 = arith.constant 72 : index
    %c0_6 = arith.constant 0 : index
    %12 = vector.load %arg7[%c72, %c0_6] : memref<144x256xf32, #tpu.memory_space<vmem>>, vector<8x256xf32>
    tpu.vector_store %arg7[%c72, %c0_6], %11 {strides = array<i32>} : memref<144x256xf32, #tpu.memory_space<vmem>>, vector<8x256xf32>,
    %c16_i32 = arith.constant 16 : i32
    %13 = tpu.dynamic_rotate %1 by %c16_i32 dim 1 : vector<16x256xf32>, i32 -> vector<16x256xf32>
    %14 = vector.extract_strided_slice %4 {offsets = [1, 0], sizes = [1, 256], strides = [1, 1]} : vector<9x256xf32> to vector<1x256xf32>
    %15 = vector.broadcast %14 : vector<1x256xf32> to vector<16x256xf32>
    %16 = arith.mulf %13, %15 : vector<16x256xf32>
    %17 = vector.extract_strided_slice %16 {offsets = [0, 0], sizes = [8, 256], strides = [1, 1]} : vector<16x256xf32> to vector<8x256xf32>
    %c8 = arith.constant 8 : index
    %c0_7 = arith.constant 0 : index
    %18 = vector.load %arg7[%c8, %c0_7] : memref<144x256xf32, #tpu.memory_space<vmem>>, vector<8x256xf32>
    tpu.vector_store %arg7[%c8, %c0_7], %17 {strides = array<i32>} : memref<144x256xf32, #tpu.memory_space<vmem>>, vector<8x256xf32>,
    %19 = vector.extract_strided_slice %16 {offsets = [8, 0], sizes = [8, 256], strides = [1, 1]} : vector<16x256xf32> to vector<8x256xf32>
    %c80 = arith.constant 80 : index
    %c0_8 = arith.constant 0 : index
    %20 = vector.load %arg7[%c80, %c0_8] : memref<144x256xf32, #tpu.memory_space<vmem>>, vector<8x256xf32>
    tpu.vector_store %arg7[%c80, %c0_8], %19 {strides = array<i32>} : memref<144x256xf32, #tpu.memory_space<vmem>>, vector<8x256xf32>,
    %c15_i32 = arith.constant 15 : i32
    %21 = tpu.dynamic_rotate %1 by %c15_i32 dim 1 : vector<16x256xf32>, i32 -> vector<16x256xf32>
    %22 = vector.extract_strided_slice %4 {offsets = [2, 0], sizes = [1, 256], strides = [1, 1]} : vector<9x256xf32> to vector<1x256xf32>
    %23 = vector.broadcast %22 : vector<1x256xf32> to vector<16x256xf32>
    %24 = arith.mulf %21, %23 : vector<16x256xf32>
    %25 = vector.extract_strided_slice %24 {offsets = [0, 0], sizes = [8, 256], strides = [1, 1]} : vector<16x256xf32> to vector<8x256xf32>
    %c16 = arith.constant 16 : index
    %c0_9 = arith.constant 0 : index
    %26 = vector.load %arg7[%c16, %c0_9] : memref<144x256xf32, #tpu.memory_space<vmem>>, vector<8x256xf32>
    tpu.vector_store %arg7[%c16, %c0_9], %25 {strides = array<i32>} : memref<144x256xf32, #tpu.memory_space<vmem>>, vector<8x256xf32>,
    %27 = vector.extract_strided_slice %24 {offsets = [8, 0], sizes = [8, 256], strides = [1, 1]} : vector<16x256xf32> to vector<8x256xf32>
    %c88 = arith.constant 88 : index
    %c0_10 = arith.constant 0 : index
    %28 = vector.load %arg7[%c88, %c0_10] : memref<144x256xf32, #tpu.memory_space<vmem>>, vector<8x256xf32>
    tpu.vector_store %arg7[%c88, %c0_10], %27 {strides = array<i32>} : memref<144x256xf32, #tpu.memory_space<vmem>>, vector<8x256xf32>,
    %c1_i32 = arith.constant 1 : i32
    %29 = tpu.dynamic_rotate %1 by %c1_i32 dim 1 : vector<16x256xf32>, i32 -> vector<16x256xf32>
    %30 = vector.extract_strided_slice %4 {offsets = [3, 0], sizes = [1, 256], strides = [1, 1]} : vector<9x256xf32> to vector<1x256xf32>
    %31 = vector.broadcast %30 : vector<1x256xf32> to vector<16x256xf32>
    %32 = arith.mulf %29, %31 : vector<16x256xf32>
    %33 = vector.extract_strided_slice %32 {offsets = [0, 0], sizes = [8, 256], strides = [1, 1]} : vector<16x256xf32> to vector<8x256xf32>
    %c24 = arith.constant 24 : index
    %c0_11 = arith.constant 0 : index
    %34 = vector.load %arg7[%c24, %c0_11] : memref<144x256xf32, #tpu.memory_space<vmem>>, vector<8x256xf32>
    tpu.vector_store %arg7[%c24, %c0_11], %33 {strides = array<i32>} : memref<144x256xf32, #tpu.memory_space<vmem>>, vector<8x256xf32>,
    %35 = vector.extract_strided_slice %32 {offsets = [8, 0], sizes = [8, 256], strides = [1, 1]} : vector<16x256xf32> to vector<8x256xf32>
    %c96 = arith.constant 96 : index
    %c0_12 = arith.constant 0 : index
    %36 = vector.load %arg7[%c96, %c0_12] : memref<144x256xf32, #tpu.memory_space<vmem>>, vector<8x256xf32>
    tpu.vector_store %arg7[%c96, %c0_12], %35 {strides = array<i32>} : memref<144x256xf32, #tpu.memory_space<vmem>>, vector<8x256xf32>,
    %37 = vector.extract_strided_slice %1 {offsets = [0, 0], sizes = [8, 256], strides = [1, 1]} : vector<16x256xf32> to vector<8x256xf32>
    %c32 = arith.constant 32 : index
    %c0_13 = arith.constant 0 : index
    %38 = vector.load %arg7[%c32, %c0_13] : memref<144x256xf32, #tpu.memory_space<vmem>>, vector<8x256xf32>
    tpu.vector_store %arg7[%c32, %c0_13], %37 {strides = array<i32>} : memref<144x256xf32, #tpu.memory_space<vmem>>, vector<8x256xf32>,
    %39 = vector.extract_strided_slice %1 {offsets = [8, 0], sizes = [8, 256], strides = [1, 1]} : vector<16x256xf32> to vector<8x256xf32>
    %c104 = arith.constant 104 : index
    %c0_14 = arith.constant 0 : index
    %40 = vector.load %arg7[%c104, %c0_14] : memref<144x256xf32, #tpu.memory_space<vmem>>, vector<8x256xf32>
    tpu.vector_store %arg7[%c104, %c0_14], %39 {strides = array<i32>} : memref<144x256xf32, #tpu.memory_space<vmem>>, vector<8x256xf32>,
    %c255_i32 = arith.constant 255 : i32
    %41 = tpu.dynamic_rotate %1 by %c255_i32 dim 1 : vector<16x256xf32>, i32 -> vector<16x256xf32>
    %42 = vector.extract_strided_slice %4 {offsets = [5, 0], sizes = [1, 256], strides = [1, 1]} : vector<9x256xf32> to vector<1x256xf32>
    %43 = vector.broadcast %42 : vector<1x256xf32> to vector<16x256xf32>
    %44 = arith.mulf %41, %43 : vector<16x256xf32>
    %45 = vector.extract_strided_slice %44 {offsets = [0, 0], sizes = [8, 256], strides = [1, 1]} : vector<16x256xf32> to vector<8x256xf32>
    %c40 = arith.constant 40 : index
    %c0_15 = arith.constant 0 : index
    %46 = vector.load %arg7[%c40, %c0_15] : memref<144x256xf32, #tpu.memory_space<vmem>>, vector<8x256xf32>
    tpu.vector_store %arg7[%c40, %c0_15], %45 {strides = array<i32>} : memref<144x256xf32, #tpu.memory_space<vmem>>, vector<8x256xf32>,
    %47 = vector.extract_strided_slice %44 {offsets = [8, 0], sizes = [8, 256], strides = [1, 1]} : vector<16x256xf32> to vector<8x256xf32>
    %c112 = arith.constant 112 : index
    %c0_16 = arith.constant 0 : index
    %48 = vector.load %arg7[%c112, %c0_16] : memref<144x256xf32, #tpu.memory_space<vmem>>, vector<8x256xf32>
    tpu.vector_store %arg7[%c112, %c0_16], %47 {strides = array<i32>} : memref<144x256xf32, #tpu.memory_space<vmem>>, vector<8x256xf32>,
    %c241_i32 = arith.constant 241 : i32
    %49 = tpu.dynamic_rotate %1 by %c241_i32 dim 1 : vector<16x256xf32>, i32 -> vector<16x256xf32>
    %50 = vector.extract_strided_slice %4 {offsets = [6, 0], sizes = [1, 256], strides = [1, 1]} : vector<9x256xf32> to vector<1x256xf32>
    %51 = vector.broadcast %50 : vector<1x256xf32> to vector<16x256xf32>
    %52 = arith.mulf %49, %51 : vector<16x256xf32>
    %53 = vector.extract_strided_slice %52 {offsets = [0, 0], sizes = [8, 256], strides = [1, 1]} : vector<16x256xf32> to vector<8x256xf32>
    %c48 = arith.constant 48 : index
    %c0_17 = arith.constant 0 : index
    %54 = vector.load %arg7[%c48, %c0_17] : memref<144x256xf32, #tpu.memory_space<vmem>>, vector<8x256xf32>
    tpu.vector_store %arg7[%c48, %c0_17], %53 {strides = array<i32>} : memref<144x256xf32, #tpu.memory_space<vmem>>, vector<8x256xf32>,
    %55 = vector.extract_strided_slice %52 {offsets = [8, 0], sizes = [8, 256], strides = [1, 1]} : vector<16x256xf32> to vector<8x256xf32>
    %c120 = arith.constant 120 : index
    %c0_18 = arith.constant 0 : index
    %56 = vector.load %arg7[%c120, %c0_18] : memref<144x256xf32, #tpu.memory_space<vmem>>, vector<8x256xf32>
    tpu.vector_store %arg7[%c120, %c0_18], %55 {strides = array<i32>} : memref<144x256xf32, #tpu.memory_space<vmem>>, vector<8x256xf32>,
    %c240_i32 = arith.constant 240 : i32
    %57 = tpu.dynamic_rotate %1 by %c240_i32 dim 1 : vector<16x256xf32>, i32 -> vector<16x256xf32>
    %58 = vector.extract_strided_slice %4 {offsets = [7, 0], sizes = [1, 256], strides = [1, 1]} : vector<9x256xf32> to vector<1x256xf32>
    %59 = vector.broadcast %58 : vector<1x256xf32> to vector<16x256xf32>
    %60 = arith.mulf %57, %59 : vector<16x256xf32>
    %61 = vector.extract_strided_slice %60 {offsets = [0, 0], sizes = [8, 256], strides = [1, 1]} : vector<16x256xf32> to vector<8x256xf32>
    %c56 = arith.constant 56 : index
    %c0_19 = arith.constant 0 : index
    %62 = vector.load %arg7[%c56, %c0_19] : memref<144x256xf32, #tpu.memory_space<vmem>>, vector<8x256xf32>
    tpu.vector_store %arg7[%c56, %c0_19], %61 {strides = array<i32>} : memref<144x256xf32, #tpu.memory_space<vmem>>, vector<8x256xf32>,
    %63 = vector.extract_strided_slice %60 {offsets = [8, 0], sizes = [8, 256], strides = [1, 1]} : vector<16x256xf32> to vector<8x256xf32>
    %c128 = arith.constant 128 : index
    %c0_20 = arith.constant 0 : index
    %64 = vector.load %arg7[%c128, %c0_20] : memref<144x256xf32, #tpu.memory_space<vmem>>, vector<8x256xf32>
    tpu.vector_store %arg7[%c128, %c0_20], %63 {strides = array<i32>} : memref<144x256xf32, #tpu.memory_space<vmem>>, vector<8x256xf32>,
    %c239_i32 = arith.constant 239 : i32
    %65 = tpu.dynamic_rotate %1 by %c239_i32 dim 1 : vector<16x256xf32>, i32 -> vector<16x256xf32>
    %66 = vector.extract_strided_slice %4 {offsets = [8, 0], sizes = [1, 256], strides = [1, 1]} : vector<9x256xf32> to vector<1x256xf32>
    %67 = vector.broadcast %66 : vector<1x256xf32> to vector<16x256xf32>
    %68 = arith.mulf %65, %67 : vector<16x256xf32>
    %69 = vector.extract_strided_slice %68 {offsets = [0, 0], sizes = [8, 256], strides = [1, 1]} : vector<16x256xf32> to vector<8x256xf32>
    %c64 = arith.constant 64 : index
    %c0_21 = arith.constant 0 : index
    %70 = vector.load %arg7[%c64, %c0_21] : memref<144x256xf32, #tpu.memory_space<vmem>>, vector<8x256xf32>
    tpu.vector_store %arg7[%c64, %c0_21], %69 {strides = array<i32>} : memref<144x256xf32, #tpu.memory_space<vmem>>, vector<8x256xf32>,
    %71 = vector.extract_strided_slice %68 {offsets = [8, 0], sizes = [8, 256], strides = [1, 1]} : vector<16x256xf32> to vector<8x256xf32>
    %c136 = arith.constant 136 : index
    %c0_22 = arith.constant 0 : index
    %72 = vector.load %arg7[%c136, %c0_22] : memref<144x256xf32, #tpu.memory_space<vmem>>, vector<8x256xf32>
    tpu.vector_store %arg7[%c136, %c0_22], %71 {strides = array<i32>} : memref<144x256xf32, #tpu.memory_space<vmem>>, vector<8x256xf32>,
    %c0_23 = arith.constant 0 : index
    %c0_24 = arith.constant 0 : index
    %73 = vector.load %arg2[%c0_23, %c0_24] : memref<112x144xf32, #tpu.memory_space<vmem>>, vector<112x144xf32>
    %c0_25 = arith.constant 0 : index
    %c0_26 = arith.constant 0 : index
    %74 = vector.load %arg7[%c0_25, %c0_26] : memref<144x256xf32, #tpu.memory_space<vmem>>, vector<144x256xf32>
    %cst = arith.constant dense<0.000000e+00> : vector<112x256xf32>
    %75 = tpu.matmul %73, %74, %cst {dimension_numbers = #tpu.dot_dimension_numbers<[1], [0], [0], [1], [0, 0, 1, 1], [], []>} : vector<112x144xf32>, vector<144x256xf32>, vector<112x256xf32> -> vector<112x256xf32>
    %76 = vector.extract_strided_slice %75 {offsets = [0, 0], sizes = [16, 256], strides = [1, 1]} : vector<112x256xf32> to vector<16x256xf32>
    %77 = vector.extract_strided_slice %75 {offsets = [16, 0], sizes = [16, 256], strides = [1, 1]} : vector<112x256xf32> to vector<16x256xf32>
    %78 = vector.extract_strided_slice %75 {offsets = [32, 0], sizes = [16, 256], strides = [1, 1]} : vector<112x256xf32> to vector<16x256xf32>
    %79 = vector.extract_strided_slice %75 {offsets = [48, 0], sizes = [32, 256], strides = [1, 1]} : vector<112x256xf32> to vector<32x256xf32>
    %80 = vector.extract_strided_slice %75 {offsets = [80, 0], sizes = [32, 256], strides = [1, 1]} : vector<112x256xf32> to vector<32x256xf32>
    %c0_27 = arith.constant 0 : index
    %c0_28 = arith.constant 0 : index
    %81 = vector.load %arg3[%c0_27, %c0_28] : memref<16x640xf32, #tpu.memory_space<vmem>>, vector<16x640xf32>
    %82 = vector.extract_strided_slice %81 {offsets = [0, 0], sizes = [16, 16], strides = [1, 1]} : vector<16x640xf32> to vector<16x16xf32>
    %83 = vector.extract_strided_slice %81 {offsets = [0, 128], sizes = [16, 32], strides = [1, 1]} : vector<16x640xf32> to vector<16x32xf32>
    %84 = vector.extract_strided_slice %81 {offsets = [0, 256], sizes = [16, 16], strides = [1, 1]} : vector<16x640xf32> to vector<16x16xf32>
    %85 = vector.extract_strided_slice %81 {offsets = [0, 384], sizes = [16, 1], strides = [1, 1]} : vector<16x640xf32> to vector<16x1xf32>
    %86 = vector.extract_strided_slice %81 {offsets = [0, 512], sizes = [16, 1], strides = [1, 1]} : vector<16x640xf32> to vector<16x1xf32>
    %87 = arith.mulf %76, %76 : vector<16x256xf32>
    %cst_29 = arith.constant dense<0.000000e+00> : vector<16xf32>
    %88 = vector.multi_reduction <add>, %87, %cst_29 [1] : vector<16x256xf32> to vector<16xf32>
    %89 = vector.shape_cast %88 : vector<16xf32> to vector<16x1xf32>
    %cst_30 = arith.constant 1.000000e-24 : f32
    %90 = vector.broadcast %cst_30 : f32 to vector<16x1xf32>
    %91 = arith.maximumf %89, %90 : vector<16x1xf32>
    %92 = math.rsqrt %91 : vector<16x1xf32>
    %93 = vector.broadcast %92 : vector<16x1xf32> to vector<16x256xf32>
    %94 = arith.mulf %76, %93 : vector<16x256xf32>
    %95 = vector.broadcast %85 : vector<16x1xf32> to vector<16x256xf32>
    %96 = arith.mulf %94, %95 : vector<16x256xf32>
    %97 = arith.mulf %77, %77 : vector<16x256xf32>
    %cst_31 = arith.constant dense<0.000000e+00> : vector<16xf32>
    %98 = vector.multi_reduction <add>, %97, %cst_31 [1] : vector<16x256xf32> to vector<16xf32>
    %99 = vector.shape_cast %98 : vector<16xf32> to vector<16x1xf32>
    %cst_32 = arith.constant 1.000000e-24 : f32
    %100 = vector.broadcast %cst_32 : f32 to vector<16x1xf32>
    %101 = arith.maximumf %99, %100 : vector<16x1xf32>
    %102 = math.rsqrt %101 : vector<16x1xf32>
    %103 = vector.broadcast %102 : vector<16x1xf32> to vector<16x256xf32>
    %104 = arith.mulf %77, %103 : vector<16x256xf32>
    %cst_33 = arith.constant dense<0.000000e+00> : vector<16x16xf32>
    %105 = tpu.matmul %96, %104, %cst_33 {dimension_numbers = #tpu.dot_dimension_numbers<[1], [1], [0], [0], [0, 0, 1, 0], [], []>} : vector<16x256xf32>, vector<16x256xf32>, vector<16x16xf32> -> vector<16x16xf32>
    %106 = arith.addf %105, %84 : vector<16x16xf32>
    %cst_34 = arith.constant dense<0xFF800000> : vector<16xf32>
    %107 = vector.multi_reduction <maximumf>, %106, %cst_34 [1] : vector<16x16xf32> to vector<16xf32>
    %108 = vector.shape_cast %107 : vector<16xf32> to vector<16x1xf32>
    %109 = vector.broadcast %108 : vector<16x1xf32> to vector<16x16xf32>
    %110 = arith.subf %106, %109 : vector<16x16xf32>
    %111 = math.exp %110 : vector<16x16xf32>
    %cst_35 = arith.constant dense<0.000000e+00> : vector<16xf32>
    %112 = vector.multi_reduction <add>, %111, %cst_35 [1] : vector<16x16xf32> to vector<16xf32>
    %113 = vector.shape_cast %112 : vector<16xf32> to vector<16x1xf32>
    %114 = tpu.reciprocal %113 {approx = true} : vector<16x1xf32> -> vector<16x1xf32>
    %115 = vector.broadcast %114 : vector<16x1xf32> to vector<16x16xf32>
    %116 = arith.mulf %111, %115 : vector<16x16xf32>
    %cst_36 = arith.constant dense<0.000000e+00> : vector<16x256xf32>
    %117 = tpu.matmul %116, %78, %cst_36 {dimension_numbers = #tpu.dot_dimension_numbers<[1], [0], [0], [1], [0, 0, 1, 1], [], []>} : vector<16x16xf32>, vector<16x256xf32>, vector<16x256xf32> -> vector<16x256xf32>
    %cst_37 = arith.constant dense<0.000000e+00> : vector<16x256xf32>
    %118 = tpu.matmul %82, %117, %cst_37 {dimension_numbers = #tpu.dot_dimension_numbers<[1], [0], [0], [1], [0, 0, 1, 1], [], []>} : vector<16x16xf32>, vector<16x256xf32>, vector<16x256xf32> -> vector<16x256xf32>
    %119 = arith.mulf %79, %79 : vector<32x256xf32>
    %120 = arith.mulf %79, %119 : vector<32x256xf32>
    %cst_38 = arith.constant 4.471500e-02 : f32
    %121 = vector.broadcast %cst_38 : f32 to vector<32x256xf32>
    %122 = arith.mulf %121, %120 : vector<32x256xf32>
    %123 = arith.addf %79, %122 : vector<32x256xf32>
    %cst_39 = arith.constant 0.797884583 : f32
    %124 = vector.broadcast %cst_39 : f32 to vector<32x256xf32>
    %125 = arith.mulf %124, %123 : vector<32x256xf32>
    %126 = math.tanh %125 : vector<32x256xf32>
    %cst_40 = arith.constant 1.000000e+00 : f32
    %127 = vector.broadcast %cst_40 : f32 to vector<32x256xf32>
    %128 = arith.addf %127, %126 : vector<32x256xf32>
    %cst_41 = arith.constant 5.000000e-01 : f32
    %129 = vector.broadcast %cst_41 : f32 to vector<32x256xf32>
    %130 = arith.mulf %129, %128 : vector<32x256xf32>
    %131 = arith.mulf %79, %130 : vector<32x256xf32>
    %132 = arith.mulf %131, %80 : vector<32x256xf32>
    %cst_42 = arith.constant dense<0.000000e+00> : vector<16x256xf32>
    %133 = tpu.matmul %83, %132, %cst_42 {dimension_numbers = #tpu.dot_dimension_numbers<[1], [0], [0], [1], [0, 0, 1, 1], [], []>} : vector<16x32xf32>, vector<32x256xf32>, vector<16x256xf32> -> vector<16x256xf32>
    %cst_43 = arith.constant 0.000000e+00 : f32
    %134 = vector.broadcast %cst_43 : f32 to vector<16x256xf32>
    %135 = arith.maximumf %133, %134 : vector<16x256xf32>
    %136 = arith.mulf %135, %118 : vector<16x256xf32>
    %137 = vector.extract_strided_slice %136 {offsets = [0, 0], sizes = [8, 256], strides = [1, 1]} : vector<16x256xf32> to vector<8x256xf32>
    %138 = vector.extract_strided_slice %136 {offsets = [8, 0], sizes = [8, 256], strides = [1, 1]} : vector<16x256xf32> to vector<8x256xf32>
    %139 = arith.negf %138 : vector<8x256xf32>
    %140 = math.exp %139 : vector<8x256xf32>
    %cst_44 = arith.constant 1.000000e+00 : f32
    %141 = vector.broadcast %cst_44 : f32 to vector<8x256xf32>
    %142 = arith.addf %141, %140 : vector<8x256xf32>
    %143 = arith.divf %141, %142 : vector<8x256xf32>
    %c0_45 = arith.constant 0 : index
    %c0_46 = arith.constant 0 : index
    %c0_47 = arith.constant 0 : index
    %144 = vector.load %arg6[%c0_45, %c0_46, %c0_47] : memref<1x16x256xf32, #tpu.memory_space<vmem>>, vector<1x8x256xf32>
    %145 = vector.shape_cast %144 : vector<1x8x256xf32> to vector<8x256xf32>
    %146 = vector.shape_cast %137 : vector<8x256xf32> to vector<1x8x256xf32>
    tpu.vector_store %arg6[%c0_45, %c0_46, %c0_47], %146 {strides = array<i32>} : memref<1x16x256xf32, #tpu.memory_space<vmem>>, vector<1x8x256xf32>,
    %c0_48 = arith.constant 0 : index
    %c8_49 = arith.constant 8 : index
    %c0_50 = arith.constant 0 : index
    %147 = vector.load %arg6[%c0_48, %c8_49, %c0_50] : memref<1x16x256xf32, #tpu.memory_space<vmem>>, vector<1x8x256xf32>
    %148 = vector.shape_cast %147 : vector<1x8x256xf32> to vector<8x256xf32>
    %149 = vector.shape_cast %143 : vector<8x256xf32> to vector<1x8x256xf32>
    tpu.vector_store %arg6[%c0_48, %c8_49, %c0_50], %149 {strides = array<i32>} : memref<1x16x256xf32, #tpu.memory_space<vmem>>, vector<1x8x256xf32>,
    %150 = arith.mulf %3, %143 : vector<8x256xf32>
    %cst_51 = arith.constant 1.000000e+00 : f32
    %151 = vector.broadcast %cst_51 : f32 to vector<8x256xf32>
    %152 = arith.subf %151, %143 : vector<8x256xf32>
    %153 = arith.mulf %137, %152 : vector<8x256xf32>
    %154 = arith.addf %150, %153 : vector<8x256xf32>
    %155 = arith.addf %154, %2 : vector<8x256xf32>
    %156 = vector.extract_strided_slice %86 {offsets = [0, 0], sizes = [8, 1], strides = [1, 1]} : vector<16x1xf32> to vector<8x1xf32>
    %157 = vector.broadcast %156 : vector<8x1xf32> to vector<8x256xf32>
    %158 = arith.mulf %157, %155 : vector<8x256xf32>
    %cst_52 = arith.constant dense<0.000000e+00> : vector<256xf32>
    %159 = vector.multi_reduction <add>, %158, %cst_52 [0] : vector<8x256xf32> to vector<256xf32>
    %160 = vector.shape_cast %159 : vector<256xf32> to vector<1x256xf32>
    %161 = vector.extract_strided_slice %86 {offsets = [8, 0], sizes = [1, 1], strides = [1, 1]} : vector<16x1xf32> to vector<1x1xf32>
    %162 = vector.broadcast %161 : vector<1x1xf32> to vector<1x256xf32>
    %163 = arith.addf %160, %162 : vector<1x256xf32>
    %c0_53 = arith.constant 0 : index
    %c0_54 = arith.constant 0 : index
    %c0_55 = arith.constant 0 : index
    %164 = vector.load %arg5[%c0_53, %c0_54, %c0_55] : memref<1x1x256xf32, #tpu.memory_space<vmem>>, vector<1x1x256xf32>
    %165 = vector.shape_cast %164 : vector<1x1x256xf32> to vector<1x256xf32>
    %166 = vector.shape_cast %163 : vector<1x256xf32> to vector<1x1x256xf32>
    tpu.vector_store %arg5[%c0_53, %c0_54, %c0_55], %166 {strides = array<i32>} : memref<1x1x256xf32, #tpu.memory_space<vmem>>, vector<1x1x256xf32>,
    return
  }
  func.func @transform_0(%arg0: i32) -> (i32, i32, i32) {
    %c0_i32 = arith.constant 0 : i32
    %c0_i32_0 = arith.constant 0 : i32
    %c0_i32_1 = arith.constant 0 : i32
    return %arg0, %c0_i32, %c0_i32_0 : i32, i32, i32
  }
  func.func @transform_1(%arg0: i32) -> (i32, i32) {
    %c0_i32 = arith.constant 0 : i32
    %c0_i32_0 = arith.constant 0 : i32
    %c0_i32_1 = arith.constant 0 : i32
    return %c0_i32, %c0_i32_0 : i32, i32
  }
  func.func @transform_2(%arg0: i32) -> (i32, i32) {
    %c0_i32 = arith.constant 0 : i32
    %c0_i32_0 = arith.constant 0 : i32
    %c0_i32_1 = arith.constant 0 : i32
    return %c0_i32, %c0_i32_0 : i32, i32
  }
  func.func @transform_3(%arg0: i32) -> (i32, i32) {
    %c0_i32 = arith.constant 0 : i32
    %c0_i32_0 = arith.constant 0 : i32
    %c0_i32_1 = arith.constant 0 : i32
    return %c0_i32, %c0_i32_0 : i32, i32
  }
  func.func @transform_4(%arg0: i32) -> (i32, i32, i32) {
    %c0_i32 = arith.constant 0 : i32
    %c0_i32_0 = arith.constant 0 : i32
    %c0_i32_1 = arith.constant 0 : i32
    return %arg0, %c0_i32, %c0_i32_0 : i32, i32, i32
  }
  func.func @transform_5(%arg0: i32) -> (i32, i32, i32) {
    %c0_i32 = arith.constant 0 : i32
    %c0_i32_0 = arith.constant 0 : i32
    %c0_i32_1 = arith.constant 0 : i32
    return %arg0, %c0_i32, %c0_i32_0 : i32, i32, i32
  }
}

</mosaic_0001>

<llo_original>
// kernel: tpu_custom_call.1
$region0: #{tpu_custom_call.1}
  #allocation0 [shape = 'u32[]', space=smem, size = 0x4, offset = 0x4, fixed_abs, tag = 'smem constant byte address 0x4 - core index']
  #allocation1 [shape = 'u32[144,128]{1,0:T(1,128)}', space=vmem, size = 0x12000, scoped, tag = 'internal scratch']
  #allocation2 [shape = 'f32[144,256]{1,0:T(8,128)}', space=vmem, size = 0x24000, scoped, tag = 'scratch operand']
  %s0 = inlined_call_operand.vmem [shape: f32[2,16,256], index: 0, kind: input, shape index: {}]
  %s1 = inlined_call_operand.vmem [shape: f32[112,144], index: 1, kind: input, shape index: {}]
  %s2 = inlined_call_operand.vmem [shape: f32[16,640], index: 2, kind: input, shape index: {}]
  %s3 = inlined_call_operand.vmem [shape: f32[9,256], index: 3, kind: input, shape index: {}]
  %s4 = inlined_call_operand.hbm [shape: f32[2,1,256], index: 4, kind: output, shape index: {0}]
  %s5 = inlined_call_operand.hbm [shape: f32[2,16,256], index: 5, kind: output, shape index: {1}]
  %6 = xla_tuple %s4, %s5
  %s7 = sld [smem:[#allocation0]]
  $region57: #{tpu_custom_call.1} parent=0
    _
  %s9 = ssub.s32 1, %s7
  %s10 = scalar_select 0, %s9, %s7
  $region1: #{tpu_custom_call.1} parent=0
    #allocation3 [shape = 'u8[2048]{0}', space=vmem, size = 0x800, scoped, tag = 'output window, operand 0']
    #allocation4 [shape = 's32[2]{0}', space=sflag, size = 0x8, scoped, tag = 'scoped memory for tpu_custom_call.1']
    #allocation5 [shape = 'u8[32768]{0}', space=vmem, size = 0x8000, scoped, tag = 'output window, operand 1']
    #allocation6 [shape = 's32[2]{0}', space=sflag, size = 0x8, scoped, tag = 'scoped memory for tpu_custom_call.1']
    %11 = vsyncpa [#allocation4], 0
    %s12 = scalar_lea.sflag [#allocation4], 1
    %13 = vsyncpa %s12, 0
    %14 = vsyncpa [#allocation6], 0
    %s15 = scalar_lea.sflag [#allocation6], 1
    %16 = vsyncpa %s15, 0
    loop: start=0, step=1, limit=4
    $region2: #{tpu_custom_call.1} parent=1 // loop_pre_header
      _
    $region3: #{tpu_custom_call.1} parent=1 // loop_header
      %s18 = sphi 0, %s22
      %p19 = scmp.ge.s32.totalorder %s18, 4
      %s28 = sphi 0, %s30
      %s31 = sphi 0, %s28
      %s32 = sphi 0, %s31
      %s48 = sphi 0, %s32
      %s52 = sphi 0, %s52
      %s54 = sphi 0, %s52
      %s55 = sphi 0, %s54
      %s69 = sphi 0, %s55
      %s73 = sphi 0, %s73
      %s75 = sphi 0, %s73
      %s76 = sphi 0, %s75
      %s90 = sphi 0, %s76
      %s94 = sphi 0, %s94
      %s96 = sphi 0, %s94
      %s97 = sphi 0, %s96
      %s111 = sphi 0, %s97
      %s117 = sphi 0, %s119
      %s120 = sphi 0, %s117
      %s121 = sphi 0, %s120
      %s137 = sphi 0, %s121
      %s143 = sphi 0, %s145
      %s146 = sphi 0, %s143
      %s147 = sphi 0, %s146
      %s163 = sphi 0, %s147
    $region4: #{tpu_custom_call.1} parent=1 // loop_header_branch
      %21 = sbr.rel (%p19) target = $region8
    $region5: #{tpu_custom_call.1} parent=1 // loop_body
      %s23 = ssub.s32 %s18, 1
      %s24 = ssub.s32 %s18, 2
      %s25 = sadd.s32 %s18, 1
      %s26 = ssub.s32 %s18, %s25
      %p27 = scmp.eq.s32.totalorder %s26, 0
      %s29 = sadd.s32 %s28, 1
      %s30 = scalar_select %p27, %s28, %s29
      %p33 = pneg %p27
      %p34 = scmp.eq.s32.totalorder %s18, 1
      %p35 = por %p33, %p34
      %p36 = scmp.ne.s32.totalorder %s28, %s31
      %p37 = scmp.eq.s32.totalorder %s18, 0
      %p38 = por %p36, %p37
      %p39 = scmp.ne.s32.totalorder %s28, %s31
      %p40 = scmp.eq.s32.totalorder %s23, 1
      %p41 = por %p39, %p40
      %p42 = scmp.ne.s32.totalorder %s31, %s32
      %p43 = scmp.eq.s32.totalorder %s23, 0
      %p44 = por %p42, %p43
      %p45 = scmp.ne.s32.totalorder %s31, %s32
      %p46 = scmp.eq.s32.totalorder %s24, 1
      %p47 = por %p45, %p46
      %p49 = scmp.ne.s32.totalorder %s32, %s48
      %p50 = scmp.eq.s32.totalorder %s24, 0
      %p51 = por %p49, %p50
      %s53 = sadd.s32 %s52, 1
      %p56 = scmp.eq.s32.totalorder %s18, 1
      %p57 = scmp.ne.s32.totalorder %s52, %s54
      %p58 = scmp.eq.s32.totalorder %s18, 0
      %p59 = por %p57, %p58
      %p60 = scmp.ne.s32.totalorder %s52, %s54
      %p61 = scmp.eq.s32.totalorder %s23, 1
      %p62 = por %p60, %p61
      %p63 = scmp.ne.s32.totalorder %s54, %s55
      %p64 = scmp.eq.s32.totalorder %s23, 0
      %p65 = por %p63, %p64
      %p66 = scmp.ne.s32.totalorder %s54, %s55
      %p67 = scmp.eq.s32.totalorder %s24, 1
      %p68 = por %p66, %p67
      %p70 = scmp.ne.s32.totalorder %s55, %s69
      %p71 = scmp.eq.s32.totalorder %s24, 0
      %p72 = por %p70, %p71
      %s74 = sadd.s32 %s73, 1
      %p77 = scmp.eq.s32.totalorder %s18, 1
      %p78 = scmp.ne.s32.totalorder %s73, %s75
      %p79 = scmp.eq.s32.totalorder %s18, 0
      %p80 = por %p78, %p79
      %p81 = scmp.ne.s32.totalorder %s73, %s75
      %p82 = scmp.eq.s32.totalorder %s23, 1
      %p83 = por %p81, %p82
      %p84 = scmp.ne.s32.totalorder %s75, %s76
      %p85 = scmp.eq.s32.totalorder %s23, 0
      %p86 = por %p84, %p85
      %p87 = scmp.ne.s32.totalorder %s75, %s76
      %p88 = scmp.eq.s32.totalorder %s24, 1
      %p89 = por %p87, %p88
      %p91 = scmp.ne.s32.totalorder %s76, %s90
      %p92 = scmp.eq.s32.totalorder %s24, 0
      %p93 = por %p91, %p92
      %s95 = sadd.s32 %s94, 1
      %p98 = scmp.eq.s32.totalorder %s18, 1
      %p99 = scmp.ne.s32.totalorder %s94, %s96
      %p100 = scmp.eq.s32.totalorder %s18, 0
      %p101 = por %p99, %p100
      %p102 = scmp.ne.s32.totalorder %s94, %s96
      %p103 = scmp.eq.s32.totalorder %s23, 1
      %p104 = por %p102, %p103
      %p105 = scmp.ne.s32.totalorder %s96, %s97
      %p106 = scmp.eq.s32.totalorder %s23, 0
      %p107 = por %p105, %p106
      %p108 = scmp.ne.s32.totalorder %s96, %s97
      %p109 = scmp.eq.s32.totalorder %s24, 1
      %p110 = por %p108, %p109
      %p112 = scmp.ne.s32.totalorder %s97, %s111
      %p113 = scmp.eq.s32.totalorder %s24, 0
      %p114 = por %p112, %p113
      %s115 = ssub.s32 %s18, %s25
      %p116 = scmp.eq.s32.totalorder %s115, 0
      %s118 = sadd.s32 %s117, 1
      %s119 = scalar_select %p116, %s117, %s118
      %p122 = pneg %p116
      %p123 = scmp.eq.s32.totalorder %s18, 1
      %p124 = por %p122, %p123
      %p125 = scmp.ne.s32.totalorder %s117, %s120
      %p126 = scmp.eq.s32.totalorder %s18, 0
      %p127 = por %p125, %p126
      %p128 = scmp.ne.s32.totalorder %s117, %s120
      %p129 = scmp.eq.s32.totalorder %s23, 1
      %p130 = por %p128, %p129
      %p131 = scmp.ne.s32.totalorder %s120, %s121
      %p132 = scmp.eq.s32.totalorder %s23, 0
      %p133 = por %p131, %p132
      %p134 = scmp.ne.s32.totalorder %s120, %s121
      %p135 = scmp.eq.s32.totalorder %s24, 1
      %p136 = por %p134, %p135
      %p138 = scmp.ne.s32.totalorder %s121, %s137
      %p139 = scmp.eq.s32.totalorder %s24, 0
      %p140 = por %p138, %p139
      %s141 = ssub.s32 %s18, %s25
      %p142 = scmp.eq.s32.totalorder %s141, 0
      %s144 = sadd.s32 %s143, 1
      %s145 = scalar_select %p142, %s143, %s144
      %p148 = pneg %p142
      %p149 = scmp.eq.s32.totalorder %s18, 1
      %p150 = por %p148, %p149
      %p151 = scmp.ne.s32.totalorder %s143, %s146
      %p152 = scmp.eq.s32.totalorder %s18, 0
      %p153 = por %p151, %p152
      %p154 = scmp.ne.s32.totalorder %s143, %s146
      %p155 = scmp.eq.s32.totalorder %s23, 1
      %p156 = por %p154, %p155
      %p157 = scmp.ne.s32.totalorder %s146, %s147
      %p158 = scmp.eq.s32.totalorder %s23, 0
      %p159 = por %p157, %p158
      %p160 = scmp.ne.s32.totalorder %s146, %s147
      %p161 = scmp.eq.s32.totalorder %s24, 1
      %p162 = por %p160, %p161
      %p164 = scmp.ne.s32.totalorder %s147, %s163
      %p165 = scmp.eq.s32.totalorder %s24, 0
      %p166 = por %p164, %p165
      %p167 = scmp.le.s32.totalorder 1, %s18
      %p168 = scmp.lt.s32.totalorder %s18, 3
      %p169 = pnand %p167, %p168
      %p170 = pneg %p169
      // Predicated region
      $region9: #{tpu_custom_call.1} parent=5 // pred_check
        _
      $region10: #{tpu_custom_call.1} parent=5 // pred_check_branch
        %172 = sbr.rel (%p169) target = $region12
      $region11: #{tpu_custom_call.1} parent=5 // pred_region
        %s173 = ssub.s32 %s18, 1
        // Predicated region
        $region13: #{tpu_custom_call.1} parent=11 // pred_check
          %p174 = pneg %p65
        $region14: #{tpu_custom_call.1} parent=11 // pred_check_branch
          %176 = sbr.rel (%p174) target = $region16
        $region15: #{tpu_custom_call.1} parent=11 // pred_region
          _
        $region16: #{tpu_custom_call.1} parent=11 // pred_fallthru
          _
        // Predicated region
        $region17: #{tpu_custom_call.1} parent=11 // pred_check
          %p177 = pneg %p86
        $region18: #{tpu_custom_call.1} parent=11 // pred_check_branch
          %179 = sbr.rel (%p177) target = $region20
        $region19: #{tpu_custom_call.1} parent=11 // pred_region
          _
        $region20: #{tpu_custom_call.1} parent=11 // pred_fallthru
          _
        // Predicated region
        $region21: #{tpu_custom_call.1} parent=11 // pred_check
          %p180 = pneg %p107
        $region22: #{tpu_custom_call.1} parent=11 // pred_check_branch
          %182 = sbr.rel (%p180) target = $region24
        $region23: #{tpu_custom_call.1} parent=11 // pred_region
          _
        $region24: #{tpu_custom_call.1} parent=11 // pred_fallthru
          _
      $region12: #{tpu_custom_call.1} parent=5 // pred_fallthru
        _
      %p183 = scmp.lt.s32.totalorder %s18, 2
      // Predicated region
      $region25: #{tpu_custom_call.1} parent=5 // pred_check
        %p184 = pneg %p183
      $region26: #{tpu_custom_call.1} parent=5 // pred_check_branch
        %186 = sbr.rel (%p184) target = $region28
      $region27: #{tpu_custom_call.1} parent=5 // pred_region
        // Predicated region
        $region29: #{tpu_custom_call.1} parent=27 // pred_check
          %p187 = pneg %p38
        $region30: #{tpu_custom_call.1} parent=27 // pred_check_branch
          %189 = sbr.rel (%p187) target = $region32
        $region31: #{tpu_custom_call.1} parent=27 // pred_region
          %p190 = scmp.lt.s32.totalorder %s18, 1
          %s191 = scalar_select %p190, %s18, 1
          %s192 = smul.addr %s191, 4
          %s193 = smul.addr %s192, 8
          %s194 = scalar_lea.vmem %s0, %s193
        $region32: #{tpu_custom_call.1} parent=27 // pred_fallthru
          _
      $region28: #{tpu_custom_call.1} parent=5 // pred_fallthru
        _
      %p195 = scmp.le.s32.totalorder 1, %s18
      %p196 = scmp.lt.s32.totalorder %s18, 3
      %p197 = pnand %p195, %p196
      %p198 = pneg %p197
      // Predicated region
      $region33: #{tpu_custom_call.1} parent=5 // pred_check
        _
      $region34: #{tpu_custom_call.1} parent=5 // pred_check_branch
        %200 = sbr.rel (%p197) target = $region36
      $region35: #{tpu_custom_call.1} parent=5 // pred_region
        %s201 = ssub.s32 %s18, 1
        %p202 = scmp.lt.s32.totalorder %s23, 1
        %s203 = scalar_select %p202, %s23, 1
        %s204 = smul.addr %s203, 4
        %s205 = smul.addr %s204, 8
        %s206 = scalar_lea.vmem %s0, %s205
        %p207 = pneg %p44
        %p208 = pneg %p41
        %p209 = pneg %p65
        %p210 = pneg %p62
        %p211 = pneg %p86
        %p212 = pneg %p83
        %p213 = pneg %p107
        %p214 = pneg %p104
        %p215 = pneg %p133
        %p216 = pneg %p130
        %s217 = sand.u32 %s120, 1
        %s218 = scalar_lea.sflag [#allocation4], %s217
        %s219 = sand.u32 %s120, 1
        %s220 = smul.addr %s219, 2
        %s221 = scalar_lea.vmem [#allocation3], %s220
        %p222 = pneg %p159
        %p223 = pneg %p156
        %s224 = sand.u32 %s146, 1
        %s225 = scalar_lea.sflag [#allocation6], %s224
        %s226 = sand.u32 %s146, 1
        %s227 = smul.addr %s226, 32
        %s228 = scalar_lea.vmem [#allocation5], %s227
        %p229 = scmp.lt.s32.totalorder %s23, 1
        %s230 = scalar_select %p229, %s23, 1
        %s231 = smul.addr %s230, 4
        %s232 = smul.addr %s231, 8
        %s233 = scalar_lea.vmem %s0, %s232
        %v234 = vld [vmem:[%s233] sm:$0xff]
        %v235 = vld [vmem:[%s233 + $0x8] sm:$0xff]
        %v236 = vld [vmem:[%s233 + $0x10] sm:$0xff]
        %v237 = vld [vmem:[%s233 + $0x18] sm:$0xff]
        %v238 = vld [vmem:[%s3] sm:$0xff]
        %v239 = vld [vmem:[%s3 + $0x8] sm:$0xff]
        %v240 = vld [vmem:[%s3 + $0x10] sm:$0x1]
        %v241 = vld [vmem:[%s3 + $0x18] sm:$0x1]
        %242 = vrot.lane.b32.xlu0 %v234, 17
        %v243 = vpop.permute.xlu0 %242
        %244 = vrot.lane.b32.xlu0 %v236, 17
        %v245 = vpop.permute.xlu0 %244
        %246 = vrot.lane.b32.xlu0 %v235, 17
        %v247 = vpop.permute.xlu0 %246
        %248 = vrot.lane.b32.xlu0 %v237, 17
        %v249 = vpop.permute.xlu0 %248
        %v250 = vlaneseq
        %v251 = vand.u32 %v250, 127
        %vm252 = vcmp.lt.s32.totalorder %v251, 17
        %v253 = vsel %vm252, %v243, %v247
        %v254 = vsel %vm252, %v245, %v249
        %v255 = vsel %vm252, %v247, %v243
        %v256 = vsel %vm252, %v249, %v245
        %v257 = vlaneseq
        %v258 = vshrl.u32 %v257, 7
        %v259 = vsub.s32 0, %v258
        %v260 = vrot.slane %v238, %v259
        %v261 = vlaneseq
        %v262 = vshrl.u32 %v261, 7
        %v263 = vsub.s32 0, %v262
        %v264 = vrot.slane %v239, %v263
        %v265 = vmul.f32 %v255, %v260
        %v266 = vmul.f32 %v253, %v264
        %v267 = vmul.f32 %v256, %v260
        %v268 = vmul.f32 %v254, %v264
        %269 = vst [vmem:[#allocation2] sm:$0xff] %v265
        %270 = vst [vmem:[#allocation2 + $0x8] sm:$0xff] %v266
        %271 = vst [vmem:[#allocation2 + $0x90] sm:$0xff] %v267
        %272 = vst [vmem:[#allocation2 + $0x98] sm:$0xff] %v268
        %273 = vrot.lane.b32.xlu0 %v234, 16
        %v274 = vpop.permute.xlu0 %273
        %275 = vrot.lane.b32.xlu0 %v236, 16
        %v276 = vpop.permute.xlu0 %275
        %277 = vrot.lane.b32.xlu0 %v235, 16
        %v278 = vpop.permute.xlu0 %277
        %279 = vrot.lane.b32.xlu0 %v237, 16
        %v280 = vpop.permute.xlu0 %279
        %vm281 = vcmp.lt.s32.totalorder %v251, 16
        %v282 = vsel %vm281, %v274, %v278
        %v283 = vsel %vm281, %v276, %v280
        %v284 = vsel %vm281, %v278, %v274
        %v285 = vsel %vm281, %v280, %v276
        %v286 = vlaneseq
        %v287 = vshrl.u32 %v286, 7
        %v288 = vsub.s32 1, %v287
        %v289 = vrot.slane %v238, %v288
        %v290 = vlaneseq
        %v291 = vshrl.u32 %v290, 7
        %v292 = vsub.s32 1, %v291
        %v293 = vrot.slane %v239, %v292
        %v294 = vmul.f32 %v284, %v289
        %v295 = vmul.f32 %v282, %v293
        %v296 = vmul.f32 %v285, %v289
        %v297 = vmul.f32 %v283, %v293
        %298 = vst [vmem:[#allocation2 + $0x10] sm:$0xff] %v294
        %299 = vst [vmem:[#allocation2 + $0x18] sm:$0xff] %v295
        %300 = vst [vmem:[#allocation2 + $0xa0] sm:$0xff] %v296
        %301 = vst [vmem:[#allocation2 + $0xa8] sm:$0xff] %v297
        %302 = vrot.lane.b32.xlu0 %v234, 15
        %v303 = vpop.permute.xlu0 %302
        %304 = vrot.lane.b32.xlu0 %v236, 15
        %v305 = vpop.permute.xlu0 %304
        %306 = vrot.lane.b32.xlu0 %v235, 15
        %v307 = vpop.permute.xlu0 %306
        %308 = vrot.lane.b32.xlu0 %v237, 15
        %v309 = vpop.permute.xlu0 %308
        %vm310 = vcmp.lt.s32.totalorder %v251, 15
        %v311 = vsel %vm310, %v303, %v307
        %v312 = vsel %vm310, %v305, %v309
        %v313 = vsel %vm310, %v307, %v303
        %v314 = vsel %vm310, %v309, %v305
        %v315 = vlaneseq
        %v316 = vshrl.u32 %v315, 7
        %v317 = vsub.s32 2, %v316
        %v318 = vrot.slane %v238, %v317
        %v319 = vlaneseq
        %v320 = vshrl.u32 %v319, 7
        %v321 = vsub.s32 2, %v320
        %v322 = vrot.slane %v239, %v321
        %v323 = vmul.f32 %v313, %v318
        %v324 = vmul.f32 %v311, %v322
        %v325 = vmul.f32 %v314, %v318
        %v326 = vmul.f32 %v312, %v322
        %327 = vst [vmem:[#allocation2 + $0x20] sm:$0xff] %v323
        %328 = vst [vmem:[#allocation2 + $0x28] sm:$0xff] %v324
        %329 = vst [vmem:[#allocation2 + $0xb0] sm:$0xff] %v325
        %330 = vst [vmem:[#allocation2 + $0xb8] sm:$0xff] %v326
        %331 = vrot.lane.b32.xlu0 %v234, 1
        %v332 = vpop.permute.xlu0 %331
        %333 = vrot.lane.b32.xlu0 %v236, 1
        %v334 = vpop.permute.xlu0 %333
        %335 = vrot.lane.b32.xlu0 %v235, 1
        %v336 = vpop.permute.xlu0 %335
        %337 = vrot.lane.b32.xlu0 %v237, 1
        %v338 = vpop.permute.xlu0 %337
        %vm339 = vcmp.lt.s32.totalorder %v251, 1
        %v340 = vsel %vm339, %v332, %v336
        %v341 = vsel %vm339, %v334, %v338
        %v342 = vsel %vm339, %v336, %v332
        %v343 = vsel %vm339, %v338, %v334
        %v344 = vlaneseq
        %v345 = vshrl.u32 %v344, 7
        %v346 = vsub.s32 3, %v345
        %v347 = vrot.slane %v238, %v346
        %v348 = vlaneseq
        %v349 = vshrl.u32 %v348, 7
        %v350 = vsub.s32 3, %v349
        %v351 = vrot.slane %v239, %v350
        %v352 = vmul.f32 %v342, %v347
        %v353 = vmul.f32 %v340, %v351
        %v354 = vmul.f32 %v343, %v347
        %v355 = vmul.f32 %v341, %v351
        %356 = vst [vmem:[#allocation2 + $0x30] sm:$0xff] %v352
        %357 = vst [vmem:[#allocation2 + $0x38] sm:$0xff] %v353
        %358 = vst [vmem:[#allocation2 + $0xc0] sm:$0xff] %v354
        %359 = vst [vmem:[#allocation2 + $0xc8] sm:$0xff] %v355
        %360 = vst [vmem:[#allocation2 + $0x40] sm:$0xff] %v234
        %361 = vst [vmem:[#allocation2 + $0x48] sm:$0xff] %v235
        %362 = vst [vmem:[#allocation2 + $0xd0] sm:$0xff] %v236
        %363 = vst [vmem:[#allocation2 + $0xd8] sm:$0xff] %v237
        %364 = vrot.lane.b32.xlu0 %v234, 127
        %v365 = vpop.permute.xlu0 %364
        %366 = vrot.lane.b32.xlu0 %v236, 127
        %v367 = vpop.permute.xlu0 %366
        %368 = vrot.lane.b32.xlu0 %v235, 127
        %v369 = vpop.permute.xlu0 %368
        %370 = vrot.lane.b32.xlu0 %v237, 127
        %v371 = vpop.permute.xlu0 %370
        %vm372 = vcmp.lt.s32.totalorder %v251, 127
        %v373 = vsel %vm372, %v365, %v369
        %v374 = vsel %vm372, %v367, %v371
        %v375 = vsel %vm372, %v369, %v365
        %v376 = vsel %vm372, %v371, %v367
        %v377 = vlaneseq
        %v378 = vshrl.u32 %v377, 7
        %v379 = vsub.s32 5, %v378
        %v380 = vrot.slane %v238, %v379
        %v381 = vlaneseq
        %v382 = vshrl.u32 %v381, 7
        %v383 = vsub.s32 5, %v382
        %v384 = vrot.slane %v239, %v383
        %v385 = vmul.f32 %v373, %v380
        %v386 = vmul.f32 %v375, %v384
        %v387 = vmul.f32 %v374, %v380
        %v388 = vmul.f32 %v376, %v384
        %389 = vst [vmem:[#allocation2 + $0x50] sm:$0xff] %v385
        %390 = vst [vmem:[#allocation2 + $0x58] sm:$0xff] %v386
        %391 = vst [vmem:[#allocation2 + $0xe0] sm:$0xff] %v387
        %392 = vst [vmem:[#allocation2 + $0xe8] sm:$0xff] %v388
        %393 = vrot.lane.b32.xlu0 %v234, 113
        %v394 = vpop.permute.xlu0 %393
        %395 = vrot.lane.b32.xlu0 %v236, 113
        %v396 = vpop.permute.xlu0 %395
        %397 = vrot.lane.b32.xlu0 %v235, 113
        %v398 = vpop.permute.xlu0 %397
        %399 = vrot.lane.b32.xlu0 %v237, 113
        %v400 = vpop.permute.xlu0 %399
        %vm401 = vcmp.lt.s32.totalorder %v251, 113
        %v402 = vsel %vm401, %v394, %v398
        %v403 = vsel %vm401, %v396, %v400
        %v404 = vsel %vm401, %v398, %v394
        %v405 = vsel %vm401, %v400, %v396
        %v406 = vlaneseq
        %v407 = vshrl.u32 %v406, 7
        %v408 = vsub.s32 6, %v407
        %v409 = vrot.slane %v238, %v408
        %v410 = vlaneseq
        %v411 = vshrl.u32 %v410, 7
        %v412 = vsub.s32 6, %v411
        %v413 = vrot.slane %v239, %v412
        %v414 = vmul.f32 %v402, %v409
        %v415 = vmul.f32 %v404, %v413
        %v416 = vmul.f32 %v403, %v409
        %v417 = vmul.f32 %v405, %v413
        %418 = vst [vmem:[#allocation2 + $0x60] sm:$0xff] %v414
        %419 = vst [vmem:[#allocation2 + $0x68] sm:$0xff] %v415
        %420 = vst [vmem:[#allocation2 + $0xf0] sm:$0xff] %v416
        %421 = vst [vmem:[#allocation2 + $0xf8] sm:$0xff] %v417
        %422 = vrot.lane.b32.xlu0 %v234, 112
        %v423 = vpop.permute.xlu0 %422
        %424 = vrot.lane.b32.xlu0 %v236, 112
        %v425 = vpop.permute.xlu0 %424
        %426 = vrot.lane.b32.xlu0 %v235, 112
        %v427 = vpop.permute.xlu0 %426
        %428 = vrot.lane.b32.xlu0 %v237, 112
        %v429 = vpop.permute.xlu0 %428
        %vm430 = vcmp.lt.s32.totalorder %v251, 112
        %v431 = vsel %vm430, %v423, %v427
        %v432 = vsel %vm430, %v425, %v429
        %v433 = vsel %vm430, %v427, %v423
        %v434 = vsel %vm430, %v429, %v425
        %v435 = vlaneseq
        %v436 = vshrl.u32 %v435, 7
        %v437 = vsub.s32 7, %v436
        %v438 = vrot.slane %v238, %v437
        %v439 = vlaneseq
        %v440 = vshrl.u32 %v439, 7
        %v441 = vsub.s32 7, %v440
        %v442 = vrot.slane %v239, %v441
        %v443 = vmul.f32 %v431, %v438
        %v444 = vmul.f32 %v433, %v442
        %v445 = vmul.f32 %v432, %v438
        %v446 = vmul.f32 %v434, %v442
        %447 = vst [vmem:[#allocation2 + $0x70] sm:$0xff] %v443
        %448 = vst [vmem:[#allocation2 + $0x78] sm:$0xff] %v444
        %449 = vst [vmem:[#allocation2 + $0x100] sm:$0xff] %v445
        %450 = vst [vmem:[#allocation2 + $0x108] sm:$0xff] %v446
        %451 = vrot.lane.b32.xlu0 %v234, 111
        %v452 = vpop.permute.xlu0 %451
        %453 = vrot.lane.b32.xlu0 %v236, 111
        %v454 = vpop.permute.xlu0 %453
        %455 = vrot.lane.b32.xlu0 %v235, 111
        %v456 = vpop.permute.xlu0 %455
        %457 = vrot.lane.b32.xlu0 %v237, 111
        %v458 = vpop.permute.xlu0 %457
        %vm459 = vcmp.lt.s32.totalorder %v251, 111
        %v460 = vsel %vm459, %v452, %v456
        %v461 = vsel %vm459, %v454, %v458
        %v462 = vsel %vm459, %v456, %v452
        %v463 = vsel %vm459, %v458, %v454
        %v464 = vlaneseq
        %v465 = vshrl.u32 %v464, 7
        %v466 = vsub.s32 0, %v465
        %v467 = vrot.slane %v240, %v466
        %v468 = vlaneseq
        %v469 = vshrl.u32 %v468, 7
        %v470 = vsub.s32 0, %v469
        %v471 = vrot.slane %v241, %v470
        %v472 = vmul.f32 %v460, %v467
        %v473 = vmul.f32 %v462, %v471
        %v474 = vmul.f32 %v461, %v467
        %v475 = vmul.f32 %v463, %v471
        %476 = vst [vmem:[#allocation2 + $0x80] sm:$0xff] %v472
        %477 = vst [vmem:[#allocation2 + $0x88] sm:$0xff] %v473
        %478 = vst [vmem:[#allocation2 + $0x110] sm:$0xff] %v474
        %479 = vst [vmem:[#allocation2 + $0x118] sm:$0xff] %v475
        %v480 = vld [vmem:[%s1] sm:$0xff]
        %v481 = vld [vmem:[%s1 + $0x8] sm:$0xff]
        %v482 = vld [vmem:[%s1 + $0x10] sm:$0xff]
        %v483 = vld [vmem:[%s1 + $0x18] sm:$0xff]
        %v484 = vld [vmem:[%s1 + $0x20] sm:$0xff]
        %v485 = vld [vmem:[%s1 + $0x28] sm:$0xff]
        %v486 = vld [vmem:[%s1 + $0x30] sm:$0xff]
        %v487 = vld [vmem:[%s1 + $0x38] sm:$0xff]
        %v488 = vld [vmem:[%s1 + $0x40] sm:$0xff]
        %v489 = vld [vmem:[%s1 + $0x48] sm:$0xff]
        %v490 = vld [vmem:[%s1 + $0x50] sm:$0xff]
        %v491 = vld [vmem:[%s1 + $0x58] sm:$0xff]
        %v492 = vld [vmem:[%s1 + $0x60] sm:$0xff]
        %v493 = vld [vmem:[%s1 + $0x68] sm:$0xff]
        %v494 = vld [vmem:[%s1 + $0x70] sm:$0xff]
        %v495 = vld [vmem:[%s1 + $0x78] sm:$0xff]
        %v496 = vld [vmem:[%s1 + $0x80] sm:$0xff]
        %v497 = vld [vmem:[%s1 + $0x88] sm:$0xff]
        %v498 = vld [vmem:[%s1 + $0x90] sm:$0xff]
        %v499 = vld [vmem:[%s1 + $0x98] sm:$0xff]
        %v500 = vld [vmem:[%s1 + $0xa0] sm:$0xff]
        %v501 = vld [vmem:[%s1 + $0xa8] sm:$0xff]
        %v502 = vld [vmem:[%s1 + $0xb0] sm:$0xff]
        %v503 = vld [vmem:[%s1 + $0xb8] sm:$0xff]
        %v504 = vld [vmem:[%s1 + $0xc0] sm:$0xff]
        %v505 = vld [vmem:[%s1 + $0xc8] sm:$0xff]
        %v506 = vld [vmem:[%s1 + $0xd0] sm:$0xff]
        %v507 = vld [vmem:[%s1 + $0xd8] sm:$0xff]
        %v508 = vld [vmem:[#allocation2] sm:$0xff]
        %v509 = vld [vmem:[#allocation2 + $0x8] sm:$0xff]
        %v510 = vld [vmem:[#allocation2 + $0x10] sm:$0xff]
        %v511 = vld [vmem:[#allocation2 + $0x18] sm:$0xff]
        %v512 = vld [vmem:[#allocation2 + $0x20] sm:$0xff]
        %v513 = vld [vmem:[#allocation2 + $0x28] sm:$0xff]
        %v514 = vld [vmem:[#allocation2 + $0x30] sm:$0xff]
        %v515 = vld [vmem:[#allocation2 + $0x38] sm:$0xff]
        %v516 = vld [vmem:[#allocation2 + $0x40] sm:$0xff]
        %v517 = vld [vmem:[#allocation2 + $0x48] sm:$0xff]
        %v518 = vld [vmem:[#allocation2 + $0x50] sm:$0xff]
        %v519 = vld [vmem:[#allocation2 + $0x58] sm:$0xff]
        %v520 = vld [vmem:[#allocation2 + $0x60] sm:$0xff]
        %v521 = vld [vmem:[#allocation2 + $0x68] sm:$0xff]
        %v522 = vld [vmem:[#allocation2 + $0x70] sm:$0xff]
        %v523 = vld [vmem:[#allocation2 + $0x78] sm:$0xff]
        %v524 = vld [vmem:[#allocation2 + $0x80] sm:$0xff]
        %v525 = vld [vmem:[#allocation2 + $0x88] sm:$0xff]
        %v526 = vld [vmem:[#allocation2 + $0x90] sm:$0xff]
        %v527 = vld [vmem:[#allocation2 + $0x98] sm:$0xff]
        %v528 = vld [vmem:[#allocation2 + $0xa0] sm:$0xff]
        %v529 = vld [vmem:[#allocation2 + $0xa8] sm:$0xff]
        %v530 = vld [vmem:[#allocation2 + $0xb0] sm:$0xff]
        %v531 = vld [vmem:[#allocation2 + $0xb8] sm:$0xff]
        %v532 = vld [vmem:[#allocation2 + $0xc0] sm:$0xff]
        %v533 = vld [vmem:[#allocation2 + $0xc8] sm:$0xff]
        %v534 = vld [vmem:[#allocation2 + $0xd0] sm:$0xff]
        %v535 = vld [vmem:[#allocation2 + $0xd8] sm:$0xff]
        %v536 = vld [vmem:[#allocation2 + $0xe0] sm:$0xff]
        %v537 = vld [vmem:[#allocation2 + $0xe8] sm:$0xff]
        %v538 = vld [vmem:[#allocation2 + $0xf0] sm:$0xff]
        %v539 = vld [vmem:[#allocation2 + $0xf8] sm:$0xff]
        %v540 = vld [vmem:[#allocation2 + $0x100] sm:$0xff]
        %v541 = vld [vmem:[#allocation2 + $0x108] sm:$0xff]
        %v542 = vld [vmem:[#allocation2 + $0x110] sm:$0xff]
        %v543 = vld [vmem:[#allocation2 + $0x118] sm:$0xff]
        %vm544 = vcmask 130048
        %v546 = vsel %vm544, %v481, 0
        %v549 = vsel %vm544, %v483, 0
        %v552 = vsel %vm544, %v485, 0
        %v555 = vsel %vm544, %v487, 0
        %v558 = vsel %vm544, %v489, 0
        %v561 = vsel %vm544, %v491, 0
        %v564 = vsel %vm544, %v493, 0
        %v567 = vsel %vm544, %v495, 0
        %v570 = vsel %vm544, %v497, 0
        %v573 = vsel %vm544, %v499, 0
        %v576 = vsel %vm544, %v501, 0
        %v579 = vsel %vm544, %v503, 0
        %v582 = vsel %vm544, %v505, 0
        %v585 = vsel %vm544, %v507, 0
        %587 = vmatprep.subr.mxu0 %v539
        %588 = vmatpush1.msra.mxu0 %v538
        %589 = vmatprep.subr.mxu0 %v537
        %590 = vmatpush1.msra.mxu0 %v536
        %591 = vmatprep.subr.mxu0 %v535
        %592 = vmatpush1.msra.mxu0 %v534
        %593 = vmatprep.subr.mxu0 %v533
        %594 = vmatpush1.msra.mxu0 %v532
        %595 = vmatprep.subr.mxu0 %v531
        %596 = vmatpush1.msra.mxu0 %v530
        %597 = vmatprep.subr.mxu0 %v529
        %598 = vmatpush1.msra.mxu0 %v528
        %599 = vmatprep.subr.mxu0 %v527
        %600 = vmatpush1.msra.mxu0 %v526
        %601 = vmatprep.subr.mxu0 %v525
        %602 = vmatpush1.msra.mxu0 %v524
        %603 = vmatprep.subr.mxu0 %v523
        %604 = vmatpush1.msra.mxu0 %v522
        %605 = vmatprep.subr.mxu0 %v521
        %606 = vmatpush1.msra.mxu0 %v520
        %607 = vmatprep.subr.mxu0 %v519
        %608 = vmatpush1.msra.mxu0 %v518
        %609 = vmatprep.subr.mxu0 %v517
        %610 = vmatpush1.msra.mxu0 %v516
        %611 = vmatprep.subr.mxu0 %v515
        %612 = vmatpush1.msra.mxu0 %v514
        %613 = vmatprep.subr.mxu0 %v513
        %614 = vmatpush1.msra.mxu0 %v512
        %615 = vmatprep.subr.mxu0 %v511
        %616 = vmatpush1.msra.mxu0 %v510
        %617 = vmatprep.subr.mxu0 %v509
        %618 = vmatpush1.msra.mxu0 %v508
        %619 = vmatprep.subr.mxu0 0.0
        %620 = vmatpush2.msra.mxu0 0.0
        %621 = vmatprep.subr.mxu0 0.0
        %622 = vmatpush2.msra.mxu0 0.0
        %623 = vmatprep.subr.mxu0 0.0
        %624 = vmatpush2.msra.mxu0 0.0
        %625 = vmatprep.subr.mxu0 0.0
        %626 = vmatpush2.msra.mxu0 0.0
        %627 = vmatprep.subr.mxu0 0.0
        %628 = vmatpush2.msra.mxu0 0.0
        %629 = vmatprep.subr.mxu0 0.0
        %630 = vmatpush2.msra.mxu0 0.0
        %631 = vmatprep.subr.mxu0 0.0
        %632 = vmatpush2.msra.mxu0 0.0
        %633 = vmatprep.subr.mxu0 0.0
        %634 = vmatpush2.msra.mxu0 0.0
        %635 = vmatprep.subr.mxu0 0.0
        %636 = vmatpush2.msra.mxu0 0.0
        %637 = vmatprep.subr.mxu0 0.0
        %638 = vmatpush2.msra.mxu0 0.0
        %639 = vmatprep.subr.mxu0 0.0
        %640 = vmatpush2.msra.mxu0 0.0
        %641 = vmatprep.subr.mxu0 0.0
        %642 = vmatpush2.msra.mxu0 0.0
        %643 = vmatprep.subr.mxu0 0.0
        %644 = vmatpush2.msra.mxu0 0.0
        %645 = vmatprep.subr.mxu0 0.0
        %646 = vmatpush2.msra.mxu0 0.0
        %647 = vmatprep.subr.mxu0 %v543
        %648 = vmatpush2.msra.mxu0 %v542
        %649 = vmatprep.subr.mxu0 %v541
        %650 = vmatpush2.msra.mxu0 %v540
        %651 = vmatprep.mubr.f32.mxu0 %v546
        %652 = vmatmul.mubr.f32.gmra.mxu0 %v480
        %v653 = vpop.f32.mrf.mxu0
        %v654 = vadd.f32 0.0, %v653
        %v655 = vpop.f32.mrf.mxu0
        %v656 = vadd.f32 0.0, %v655
        %657 = vmatprep.mubr.f32.mxu0 %v549
        %658 = vmatmul.mubr.f32.gmra.mxu0 %v482
        %v659 = vpop.f32.mrf.mxu0
        %v660 = vadd.f32 0.0, %v659
        %v661 = vpop.f32.mrf.mxu0
        %v662 = vadd.f32 0.0, %v661
        %663 = vmatprep.mubr.f32.mxu0 %v552
        %664 = vmatmul.mubr.f32.gmra.mxu0 %v484
        %v665 = vpop.f32.mrf.mxu0
        %v666 = vadd.f32 0.0, %v665
        %v667 = vpop.f32.mrf.mxu0
        %v668 = vadd.f32 0.0, %v667
        %669 = vmatprep.mubr.f32.mxu0 %v555
        %670 = vmatmul.mubr.f32.gmra.mxu0 %v486
        %v671 = vpop.f32.mrf.mxu0
        %v672 = vadd.f32 0.0, %v671
        %v673 = vpop.f32.mrf.mxu0
        %v674 = vadd.f32 0.0, %v673
        %675 = vmatprep.mubr.f32.mxu0 %v558
        %676 = vmatmul.mubr.f32.gmra.mxu0 %v488
        %v677 = vpop.f32.mrf.mxu0
        %v678 = vadd.f32 0.0, %v677
        %v679 = vpop.f32.mrf.mxu0
        %v680 = vadd.f32 0.0, %v679
        %681 = vmatprep.mubr.f32.mxu0 %v561
        %682 = vmatmul.mubr.f32.gmra.mxu0 %v490
        %v683 = vpop.f32.mrf.mxu0
        %v684 = vadd.f32 0.0, %v683
        %v685 = vpop.f32.mrf.mxu0
        %v686 = vadd.f32 0.0, %v685
        %687 = vmatprep.mubr.f32.mxu0 %v564
        %688 = vmatmul.mubr.f32.gmra.mxu0 %v492
        %v689 = vpop.f32.mrf.mxu0
        %v690 = vadd.f32 0.0, %v689
        %v691 = vpop.f32.mrf.mxu0
        %v692 = vadd.f32 0.0, %v691
        %693 = vmatprep.mubr.f32.mxu0 %v567
        %694 = vmatmul.mubr.f32.gmra.mxu0 %v494
        %v695 = vpop.f32.mrf.mxu0
        %v696 = vadd.f32 0.0, %v695
        %v697 = vpop.f32.mrf.mxu0
        %v698 = vadd.f32 0.0, %v697
        %699 = vmatprep.mubr.f32.mxu0 %v570
        %700 = vmatmul.mubr.f32.gmra.mxu0 %v496
        %v701 = vpop.f32.mrf.mxu0
        %v702 = vadd.f32 0.0, %v701
        %v703 = vpop.f32.mrf.mxu0
        %v704 = vadd.f32 0.0, %v703
        %705 = vmatprep.mubr.f32.mxu0 %v573
        %706 = vmatmul.mubr.f32.gmra.mxu0 %v498
        %v707 = vpop.f32.mrf.mxu0
        %v708 = vadd.f32 0.0, %v707
        %v709 = vpop.f32.mrf.mxu0
        %v710 = vadd.f32 0.0, %v709
        %711 = vmatprep.mubr.f32.mxu0 %v576
        %712 = vmatmul.mubr.f32.gmra.mxu0 %v500
        %v713 = vpop.f32.mrf.mxu0
        %v714 = vadd.f32 0.0, %v713
        %v715 = vpop.f32.mrf.mxu0
        %v716 = vadd.f32 0.0, %v715
        %717 = vmatprep.mubr.f32.mxu0 %v579
        %718 = vmatmul.mubr.f32.gmra.mxu0 %v502
        %v719 = vpop.f32.mrf.mxu0
        %v720 = vadd.f32 0.0, %v719
        %v721 = vpop.f32.mrf.mxu0
        %v722 = vadd.f32 0.0, %v721
        %723 = vmatprep.mubr.f32.mxu0 %v582
        %724 = vmatmul.mubr.f32.gmra.mxu0 %v504
        %v725 = vpop.f32.mrf.mxu0
        %v726 = vadd.f32 0.0, %v725
        %v727 = vpop.f32.mrf.mxu0
        %v728 = vadd.f32 0.0, %v727
        %729 = vmatprep.mubr.f32.mxu0 %v585
        %730 = vmatmul.mubr.f32.gmra.mxu0 %v506
        %v731 = vpop.f32.mrf.mxu0
        %v732 = vadd.f32 0.0, %v731
        %v733 = vpop.f32.mrf.mxu0
        %v734 = vadd.f32 0.0, %v733
        %735 = vdwg.mxu0
        %v736 = vld [vmem:[%s2] sm:$0xff]
        %v737 = vld [vmem:[%s2 + $0x8] sm:$0xff]
        %v738 = vld [vmem:[%s2 + $0x10] sm:$0xff]
        %v739 = vld [vmem:[%s2 + $0x18] sm:$0xff]
        %v740 = vld [vmem:[%s2 + $0x20] sm:$0xff]
        %v741 = vld [vmem:[%s2 + $0x28] sm:$0xff]
        %v742 = vld [vmem:[%s2 + $0x30] sm:$0xff]
        %v743 = vld [vmem:[%s2 + $0x38] sm:$0xff]
        %v744 = vld [vmem:[%s2 + $0x40] sm:$0xff]
        %v745 = vld [vmem:[%s2 + $0x48] sm:$0xff]
        %v746 = vmul.f32 %v654, %v654
        %v747 = vmul.f32 %v656, %v656
        %v748 = vmul.f32 %v660, %v660
        %v749 = vmul.f32 %v662, %v662
        %v750 = vadd.f32 %v746, %v747
        %751 = vadd.xlane.f32.xlu0 %v750
        %v752 = vpop.xlane.xlu0 %751
        %v753 = vadd.f32 %v748, %v749
        %754 = vadd.xlane.f32.xlu0 %v753
        %v755 = vpop.xlane.xlu0 %754
        %v756 = vmax.f32 %v752, 1e-24
        %v757 = vmax.f32 %v755, 1e-24
        %v758 = vrsqrt.pop %v756
        %v759 = vrsqrt.pop %v757
        %v760 = vmul.f32 %v654, %v758
        %v761 = vmul.f32 %v656, %v758
        %v762 = vmul.f32 %v660, %v759
        %v763 = vmul.f32 %v662, %v759
        %765 = vset.pattern.permute.xlu0 0
        %766 = vperm.xlu0 %765, %v739
        %v767 = vpop.permute.xlu0 %766
        %770 = vset.pattern.permute.xlu0 0
        %771 = vperm.xlu0 %770, %v744
        %v772 = vpop.permute.xlu0 %771
        %v774 = vmul.f32 %v760, %v767
        %v775 = vmul.f32 %v761, %v767
        %v776 = vmul.f32 %v762, %v772
        %v777 = vmul.f32 %v763, %v772
        %v778 = vmul.f32 %v666, %v666
        %v779 = vmul.f32 %v668, %v668
        %v780 = vmul.f32 %v672, %v672
        %v781 = vmul.f32 %v674, %v674
        %v782 = vadd.f32 %v778, %v779
        %783 = vadd.xlane.f32.xlu0 %v782
        %v784 = vpop.xlane.xlu0 %783
        %v785 = vadd.f32 %v780, %v781
        %786 = vadd.xlane.f32.xlu0 %v785
        %v787 = vpop.xlane.xlu0 %786
        %v788 = vmax.f32 %v784, 1e-24
        %v789 = vmax.f32 %v787, 1e-24
        %v790 = vrsqrt.pop %v788
        %v791 = vrsqrt.pop %v789
        %v792 = vmul.f32 %v666, %v790
        %v793 = vmul.f32 %v668, %v790
        %v794 = vmul.f32 %v672, %v791
        %v795 = vmul.f32 %v674, %v791
        %796 = vmatprep.subr.mxu0 0.0
        %797 = vmatpush1.xpose.msra.mxu0 0.0
        %798 = vmatprep.subr.mxu0 0.0
        %799 = vmatpush1.xpose.msra.mxu0 0.0
        %800 = vmatprep.subr.mxu0 0.0
        %801 = vmatpush1.xpose.msra.mxu0 0.0
        %802 = vmatprep.subr.mxu0 0.0
        %803 = vmatpush1.xpose.msra.mxu0 0.0
        %804 = vmatprep.subr.mxu0 0.0
        %805 = vmatpush1.xpose.msra.mxu0 0.0
        %806 = vmatprep.subr.mxu0 0.0
        %807 = vmatpush1.xpose.msra.mxu0 0.0
        %808 = vmatprep.subr.mxu0 0.0
        %809 = vmatpush1.xpose.msra.mxu0 0.0
        %810 = vmatprep.subr.mxu0 0.0
        %811 = vmatpush1.xpose.msra.mxu0 0.0
        %812 = vmatprep.subr.mxu0 0.0
        %813 = vmatpush1.xpose.msra.mxu0 0.0
        %814 = vmatprep.subr.mxu0 0.0
        %815 = vmatpush1.xpose.msra.mxu0 0.0
        %816 = vmatprep.subr.mxu0 0.0
        %817 = vmatpush1.xpose.msra.mxu0 0.0
        %818 = vmatprep.subr.mxu0 0.0
        %819 = vmatpush1.xpose.msra.mxu0 0.0
        %820 = vmatprep.subr.mxu0 0.0
        %821 = vmatpush1.xpose.msra.mxu0 0.0
        %822 = vmatprep.subr.mxu0 0.0
        %823 = vmatpush1.xpose.msra.mxu0 0.0
        %824 = vmatprep.subr.mxu0 %v795
        %825 = vmatpush1.xpose.msra.mxu0 %v794
        %826 = vmatprep.subr.mxu0 %v793
        %827 = vmatpush1.xpose.msra.mxu0 %v792
        %828 = vmatprep.subr.mxu0 0.0
        %829 = vmatpush2.xpose.msra.mxu0 0.0
        %830 = vmatprep.subr.mxu0 0.0
        %831 = vmatpush2.xpose.msra.mxu0 0.0
        %832 = vmatprep.subr.mxu0 0.0
        %833 = vmatpush2.xpose.msra.mxu0 0.0
        %834 = vmatprep.subr.mxu0 0.0
        %835 = vmatpush2.xpose.msra.mxu0 0.0
        %836 = vmatprep.subr.mxu0 0.0
        %837 = vmatpush2.xpose.msra.mxu0 0.0
        %838 = vmatprep.subr.mxu0 0.0
        %839 = vmatpush2.xpose.msra.mxu0 0.0
        %840 = vmatprep.subr.mxu0 0.0
        %841 = vmatpush2.xpose.msra.mxu0 0.0
        %842 = vmatprep.subr.mxu0 0.0
        %843 = vmatpush2.xpose.msra.mxu0 0.0
        %844 = vmatprep.subr.mxu0 0.0
        %845 = vmatpush2.xpose.msra.mxu0 0.0
        %846 = vmatprep.subr.mxu0 0.0
        %847 = vmatpush2.xpose.msra.mxu0 0.0
        %848 = vmatprep.subr.mxu0 0.0
        %849 = vmatpush2.xpose.msra.mxu0 0.0
        %850 = vmatprep.subr.mxu0 0.0
        %851 = vmatpush2.xpose.msra.mxu0 0.0
        %852 = vmatprep.subr.mxu0 0.0
        %853 = vmatpush2.xpose.msra.mxu0 0.0
        %854 = vmatprep.subr.mxu0 0.0
        %855 = vmatpush2.xpose.msra.mxu0 0.0
        %856 = vmatprep.subr.mxu0 0.0
        %857 = vmatpush2.xpose.msra.mxu0 0.0
        %858 = vmatprep.subr.mxu0 0.0
        %859 = vmatpush2.xpose.msra.mxu0 0.0
        %860 = vmatprep.mubr.f32.mxu0 %v775
        %861 = vmatmul.mubr.f32.gmra.mxu0 %v774
        %v862 = vpop.f32.mrf.mxu0
        %v863 = vadd.f32 %v738, %v862
        %v864 = vpop.f32.mrf.mxu0
        %865 = vmatprep.mubr.f32.mxu0 %v777
        %866 = vmatmul.mubr.f32.gmra.mxu0 %v776
        %v867 = vpop.f32.mrf.mxu0
        %v868 = vadd.f32 %v743, %v867
        %v869 = vpop.f32.mrf.mxu0
        %870 = vdwg.mxu0
        %v871 = vsel %vm544, %v863, -inf
        %872 = vmax.xlane.f32.xlu0 %v871
        %v873 = vpop.xlane.xlu0 %872
        %v874 = vsel %vm544, %v868, -inf
        %875 = vmax.xlane.f32.xlu0 %v874
        %v876 = vpop.xlane.xlu0 %875
        %v877 = vsub.f32 %v863, %v873
        %v878 = vsub.f32 %v868, %v876
        %v879 = vmul.f32 %v877, 1.442695
        %v880 = vpow.pop %v879
        %v881 = vmul.f32 %v878, 1.442695
        %v882 = vpow.pop %v881
        %v883 = vsel %vm544, %v880, 0.0
        %884 = vadd.xlane.f32.xlu0 %v883
        %v885 = vpop.xlane.xlu0 %884
        %v886 = vsel %vm544, %v882, 0.0
        %887 = vadd.xlane.f32.xlu0 %v886
        %v888 = vpop.xlane.xlu0 %887
        %v889 = vrcp.pop %v885
        %v890 = vrcp.pop %v888
        %v891 = vmul.f32 %v880, %v889
        %v892 = vmul.f32 %v882, %v890
        %v894 = vsel %vm544, %v891, 0
        %v897 = vsel %vm544, %v892, 0
        %899 = vmatprep.subr.mxu0 0.0
        %900 = vmatpush1.msra.mxu0 0.0
        %901 = vmatprep.subr.mxu0 0.0
        %902 = vmatpush1.msra.mxu0 0.0
        %903 = vmatprep.subr.mxu0 0.0
        %904 = vmatpush1.msra.mxu0 0.0
        %905 = vmatprep.subr.mxu0 0.0
        %906 = vmatpush1.msra.mxu0 0.0
        %907 = vmatprep.subr.mxu0 0.0
        %908 = vmatpush1.msra.mxu0 0.0
        %909 = vmatprep.subr.mxu0 0.0
        %910 = vmatpush1.msra.mxu0 0.0
        %911 = vmatprep.subr.mxu0 0.0
        %912 = vmatpush1.msra.mxu0 0.0
        %913 = vmatprep.subr.mxu0 0.0
        %914 = vmatpush1.msra.mxu0 0.0
        %915 = vmatprep.subr.mxu0 0.0
        %916 = vmatpush1.msra.mxu0 0.0
        %917 = vmatprep.subr.mxu0 0.0
        %918 = vmatpush1.msra.mxu0 0.0
        %919 = vmatprep.subr.mxu0 0.0
        %920 = vmatpush1.msra.mxu0 0.0
        %921 = vmatprep.subr.mxu0 0.0
        %922 = vmatpush1.msra.mxu0 0.0
        %923 = vmatprep.subr.mxu0 0.0
        %924 = vmatpush1.msra.mxu0 0.0
        %925 = vmatprep.subr.mxu0 0.0
        %926 = vmatpush1.msra.mxu0 0.0
        %927 = vmatprep.subr.mxu0 %v686
        %928 = vmatpush1.msra.mxu0 %v684
        %929 = vmatprep.subr.mxu0 %v680
        %930 = vmatpush1.msra.mxu0 %v678
        %931 = vmatprep.subr.mxu0 0.0
        %932 = vmatpush2.msra.mxu0 0.0
        %933 = vmatprep.subr.mxu0 0.0
        %934 = vmatpush2.msra.mxu0 0.0
        %935 = vmatprep.subr.mxu0 0.0
        %936 = vmatpush2.msra.mxu0 0.0
        %937 = vmatprep.subr.mxu0 0.0
        %938 = vmatpush2.msra.mxu0 0.0
        %939 = vmatprep.subr.mxu0 0.0
        %940 = vmatpush2.msra.mxu0 0.0
        %941 = vmatprep.subr.mxu0 0.0
        %942 = vmatpush2.msra.mxu0 0.0
        %943 = vmatprep.subr.mxu0 0.0
        %944 = vmatpush2.msra.mxu0 0.0
        %945 = vmatprep.subr.mxu0 0.0
        %946 = vmatpush2.msra.mxu0 0.0
        %947 = vmatprep.subr.mxu0 0.0
        %948 = vmatpush2.msra.mxu0 0.0
        %949 = vmatprep.subr.mxu0 0.0
        %950 = vmatpush2.msra.mxu0 0.0
        %951 = vmatprep.subr.mxu0 0.0
        %952 = vmatpush2.msra.mxu0 0.0
        %953 = vmatprep.subr.mxu0 0.0
        %954 = vmatpush2.msra.mxu0 0.0
        %955 = vmatprep.subr.mxu0 0.0
        %956 = vmatpush2.msra.mxu0 0.0
        %957 = vmatprep.subr.mxu0 0.0
        %958 = vmatpush2.msra.mxu0 0.0
        %959 = vmatprep.subr.mxu0 0.0
        %960 = vmatpush2.msra.mxu0 0.0
        %961 = vmatprep.subr.mxu0 0.0
        %962 = vmatpush2.msra.mxu0 0.0
        %963 = vmatprep.mubr.f32.mxu0 0.0
        %964 = vmatmul.mubr.f32.gmra.mxu0 %v894
        %v965 = vpop.f32.mrf.mxu0
        %v966 = vadd.f32 0.0, %v965
        %v967 = vpop.f32.mrf.mxu0
        %v968 = vadd.f32 0.0, %v967
        %969 = vmatprep.mubr.f32.mxu0 0.0
        %970 = vmatmul.mubr.f32.gmra.mxu0 %v897
        %v971 = vpop.f32.mrf.mxu0
        %v972 = vadd.f32 0.0, %v971
        %v973 = vpop.f32.mrf.mxu0
        %v974 = vadd.f32 0.0, %v973
        %975 = vdwg.mxu0
        %v977 = vsel %vm544, %v736, 0
        %v980 = vsel %vm544, %v741, 0
        %982 = vmatprep.subr.mxu0 0.0
        %983 = vmatpush1.msra.mxu0 0.0
        %984 = vmatprep.subr.mxu0 0.0
        %985 = vmatpush1.msra.mxu0 0.0
        %986 = vmatprep.subr.mxu0 0.0
        %987 = vmatpush1.msra.mxu0 0.0
        %988 = vmatprep.subr.mxu0 0.0
        %989 = vmatpush1.msra.mxu0 0.0
        %990 = vmatprep.subr.mxu0 0.0
        %991 = vmatpush1.msra.mxu0 0.0
        %992 = vmatprep.subr.mxu0 0.0
        %993 = vmatpush1.msra.mxu0 0.0
        %994 = vmatprep.subr.mxu0 0.0
        %995 = vmatpush1.msra.mxu0 0.0
        %996 = vmatprep.subr.mxu0 0.0
        %997 = vmatpush1.msra.mxu0 0.0
        %998 = vmatprep.subr.mxu0 0.0
        %999 = vmatpush1.msra.mxu0 0.0
        %1000 = vmatprep.subr.mxu0 0.0
        %1001 = vmatpush1.msra.mxu0 0.0
        %1002 = vmatprep.subr.mxu0 0.0
        %1003 = vmatpush1.msra.mxu0 0.0
        %1004 = vmatprep.subr.mxu0 0.0
        %1005 = vmatpush1.msra.mxu0 0.0
        %1006 = vmatprep.subr.mxu0 0.0
        %1007 = vmatpush1.msra.mxu0 0.0
        %1008 = vmatprep.subr.mxu0 0.0
        %1009 = vmatpush1.msra.mxu0 0.0
        %1010 = vmatprep.subr.mxu0 %v974
        %1011 = vmatpush1.msra.mxu0 %v972
        %1012 = vmatprep.subr.mxu0 %v968
        %1013 = vmatpush1.msra.mxu0 %v966
        %1014 = vmatprep.subr.mxu0 0.0
        %1015 = vmatpush2.msra.mxu0 0.0
        %1016 = vmatprep.subr.mxu0 0.0
        %1017 = vmatpush2.msra.mxu0 0.0
        %1018 = vmatprep.subr.mxu0 0.0
        %1019 = vmatpush2.msra.mxu0 0.0
        %1020 = vmatprep.subr.mxu0 0.0
        %1021 = vmatpush2.msra.mxu0 0.0
        %1022 = vmatprep.subr.mxu0 0.0
        %1023 = vmatpush2.msra.mxu0 0.0
        %1024 = vmatprep.subr.mxu0 0.0
        %1025 = vmatpush2.msra.mxu0 0.0
        %1026 = vmatprep.subr.mxu0 0.0
        %1027 = vmatpush2.msra.mxu0 0.0
        %1028 = vmatprep.subr.mxu0 0.0
        %1029 = vmatpush2.msra.mxu0 0.0
        %1030 = vmatprep.subr.mxu0 0.0
        %1031 = vmatpush2.msra.mxu0 0.0
        %1032 = vmatprep.subr.mxu0 0.0
        %1033 = vmatpush2.msra.mxu0 0.0
        %1034 = vmatprep.subr.mxu0 0.0
        %1035 = vmatpush2.msra.mxu0 0.0
        %1036 = vmatprep.subr.mxu0 0.0
        %1037 = vmatpush2.msra.mxu0 0.0
        %1038 = vmatprep.subr.mxu0 0.0
        %1039 = vmatpush2.msra.mxu0 0.0
        %1040 = vmatprep.subr.mxu0 0.0
        %1041 = vmatpush2.msra.mxu0 0.0
        %1042 = vmatprep.subr.mxu0 0.0
        %1043 = vmatpush2.msra.mxu0 0.0
        %1044 = vmatprep.subr.mxu0 0.0
        %1045 = vmatpush2.msra.mxu0 0.0
        %1046 = vmatprep.mubr.f32.mxu0 0.0
        %1047 = vmatmul.mubr.f32.gmra.mxu0 %v977
        %v1048 = vpop.f32.mrf.mxu0
        %v1049 = vadd.f32 0.0, %v1048
        %v1050 = vpop.f32.mrf.mxu0
        %v1051 = vadd.f32 0.0, %v1050
        %1052 = vmatprep.mubr.f32.mxu0 0.0
        %1053 = vmatmul.mubr.f32.gmra.mxu0 %v980
        %v1054 = vpop.f32.mrf.mxu0
        %v1055 = vadd.f32 0.0, %v1054
        %v1056 = vpop.f32.mrf.mxu0
        %v1057 = vadd.f32 0.0, %v1056
        %1058 = vdwg.mxu0
        %v1059 = vmul.f32 %v690, %v690
        %v1060 = vmul.f32 %v692, %v692
        %v1061 = vmul.f32 %v696, %v696
        %v1062 = vmul.f32 %v698, %v698
        %v1063 = vmul.f32 %v702, %v702
        %v1064 = vmul.f32 %v704, %v704
        %v1065 = vmul.f32 %v708, %v708
        %v1066 = vmul.f32 %v710, %v710
        %v1067 = vmul.f32 %v690, %v1059
        %v1068 = vmul.f32 %v692, %v1060
        %v1069 = vmul.f32 %v696, %v1061
        %v1070 = vmul.f32 %v698, %v1062
        %v1071 = vmul.f32 %v702, %v1063
        %v1072 = vmul.f32 %v704, %v1064
        %v1073 = vmul.f32 %v708, %v1065
        %v1074 = vmul.f32 %v710, %v1066
        %v1075 = vmul.f32 %v1067, 0.044715
        %v1076 = vmul.f32 %v1068, 0.044715
        %v1077 = vmul.f32 %v1069, 0.044715
        %v1078 = vmul.f32 %v1070, 0.044715
        %v1079 = vmul.f32 %v1071, 0.044715
        %v1080 = vmul.f32 %v1072, 0.044715
        %v1081 = vmul.f32 %v1073, 0.044715
        %v1082 = vmul.f32 %v1074, 0.044715
        %v1083 = vadd.f32 %v690, %v1075
        %v1084 = vadd.f32 %v692, %v1076
        %v1085 = vadd.f32 %v696, %v1077
        %v1086 = vadd.f32 %v698, %v1078
        %v1087 = vadd.f32 %v702, %v1079
        %v1088 = vadd.f32 %v704, %v1080
        %v1089 = vadd.f32 %v708, %v1081
        %v1090 = vadd.f32 %v710, %v1082
        %v1091 = vmul.f32 %v1083, 0.7978846
        %v1092 = vmul.f32 %v1084, 0.7978846
        %v1093 = vmul.f32 %v1085, 0.7978846
        %v1094 = vmul.f32 %v1086, 0.7978846
        %v1095 = vmul.f32 %v1087, 0.7978846
        %v1096 = vmul.f32 %v1088, 0.7978846
        %v1097 = vmul.f32 %v1089, 0.7978846
        %v1098 = vmul.f32 %v1090, 0.7978846
        %v1099 = vtanh.pop %v1091
        %v1100 = vtanh.pop %v1092
        %v1101 = vtanh.pop %v1093
        %v1102 = vtanh.pop %v1094
        %v1103 = vtanh.pop %v1095
        %v1104 = vtanh.pop %v1096
        %v1105 = vtanh.pop %v1097
        %v1106 = vtanh.pop %v1098
        %v1107 = vadd.f32 %v1099, 1.0
        %v1108 = vadd.f32 %v1100, 1.0
        %v1109 = vadd.f32 %v1101, 1.0
        %v1110 = vadd.f32 %v1102, 1.0
        %v1111 = vadd.f32 %v1103, 1.0
        %v1112 = vadd.f32 %v1104, 1.0
        %v1113 = vadd.f32 %v1105, 1.0
        %v1114 = vadd.f32 %v1106, 1.0
        %v1115 = vmul.f32 %v1107, 0.5
        %v1116 = vmul.f32 %v1108, 0.5
        %v1117 = vmul.f32 %v1109, 0.5
        %v1118 = vmul.f32 %v1110, 0.5
        %v1119 = vmul.f32 %v1111, 0.5
        %v1120 = vmul.f32 %v1112, 0.5
        %v1121 = vmul.f32 %v1113, 0.5
        %v1122 = vmul.f32 %v1114, 0.5
        %v1123 = vmul.f32 %v690, %v1115
        %v1124 = vmul.f32 %v692, %v1116
        %v1125 = vmul.f32 %v696, %v1117
        %v1126 = vmul.f32 %v698, %v1118
        %v1127 = vmul.f32 %v702, %v1119
        %v1128 = vmul.f32 %v704, %v1120
        %v1129 = vmul.f32 %v708, %v1121
        %v1130 = vmul.f32 %v710, %v1122
        %v1131 = vmul.f32 %v1123, %v714
        %v1132 = vmul.f32 %v1124, %v716
        %v1133 = vmul.f32 %v1125, %v720
        %v1134 = vmul.f32 %v1126, %v722
        %v1135 = vmul.f32 %v1127, %v726
        %v1136 = vmul.f32 %v1128, %v728
        %v1137 = vmul.f32 %v1129, %v732
        %v1138 = vmul.f32 %v1130, %v734
        %vm1139 = vcmask 261120
        %v1141 = vsel %vm1139, %v737, 0
        %v1144 = vsel %vm1139, %v742, 0
        %1146 = vmatprep.subr.mxu0 0.0
        %1147 = vmatpush1.msra.mxu0 0.0
        %1148 = vmatprep.subr.mxu0 0.0
        %1149 = vmatpush1.msra.mxu0 0.0
        %1150 = vmatprep.subr.mxu0 0.0
        %1151 = vmatpush1.msra.mxu0 0.0
        %1152 = vmatprep.subr.mxu0 0.0
        %1153 = vmatpush1.msra.mxu0 0.0
        %1154 = vmatprep.subr.mxu0 0.0
        %1155 = vmatpush1.msra.mxu0 0.0
        %1156 = vmatprep.subr.mxu0 0.0
        %1157 = vmatpush1.msra.mxu0 0.0
        %1158 = vmatprep.subr.mxu0 0.0
        %1159 = vmatpush1.msra.mxu0 0.0
        %1160 = vmatprep.subr.mxu0 0.0
        %1161 = vmatpush1.msra.mxu0 0.0
        %1162 = vmatprep.subr.mxu0 0.0
        %1163 = vmatpush1.msra.mxu0 0.0
        %1164 = vmatprep.subr.mxu0 0.0
        %1165 = vmatpush1.msra.mxu0 0.0
        %1166 = vmatprep.subr.mxu0 0.0
        %1167 = vmatpush1.msra.mxu0 0.0
        %1168 = vmatprep.subr.mxu0 0.0
        %1169 = vmatpush1.msra.mxu0 0.0
        %1170 = vmatprep.subr.mxu0 %v1138
        %1171 = vmatpush1.msra.mxu0 %v1137
        %1172 = vmatprep.subr.mxu0 %v1136
        %1173 = vmatpush1.msra.mxu0 %v1135
        %1174 = vmatprep.subr.mxu0 %v1134
        %1175 = vmatpush1.msra.mxu0 %v1133
        %1176 = vmatprep.subr.mxu0 %v1132
        %1177 = vmatpush1.msra.mxu0 %v1131
        %1178 = vmatprep.subr.mxu0 0.0
        %1179 = vmatpush2.msra.mxu0 0.0
        %1180 = vmatprep.subr.mxu0 0.0
        %1181 = vmatpush2.msra.mxu0 0.0
        %1182 = vmatprep.subr.mxu0 0.0
        %1183 = vmatpush2.msra.mxu0 0.0
        %1184 = vmatprep.subr.mxu0 0.0
        %1185 = vmatpush2.msra.mxu0 0.0
        %1186 = vmatprep.subr.mxu0 0.0
        %1187 = vmatpush2.msra.mxu0 0.0
        %1188 = vmatprep.subr.mxu0 0.0
        %1189 = vmatpush2.msra.mxu0 0.0
        %1190 = vmatprep.subr.mxu0 0.0
        %1191 = vmatpush2.msra.mxu0 0.0
        %1192 = vmatprep.subr.mxu0 0.0
        %1193 = vmatpush2.msra.mxu0 0.0
        %1194 = vmatprep.subr.mxu0 0.0
        %1195 = vmatpush2.msra.mxu0 0.0
        %1196 = vmatprep.subr.mxu0 0.0
        %1197 = vmatpush2.msra.mxu0 0.0
        %1198 = vmatprep.subr.mxu0 0.0
        %1199 = vmatpush2.msra.mxu0 0.0
        %1200 = vmatprep.subr.mxu0 0.0
        %1201 = vmatpush2.msra.mxu0 0.0
        %1202 = vmatprep.subr.mxu0 0.0
        %1203 = vmatpush2.msra.mxu0 0.0
        %1204 = vmatprep.subr.mxu0 0.0
        %1205 = vmatpush2.msra.mxu0 0.0
        %1206 = vmatprep.subr.mxu0 0.0
        %1207 = vmatpush2.msra.mxu0 0.0
        %1208 = vmatprep.subr.mxu0 0.0
        %1209 = vmatpush2.msra.mxu0 0.0
        %1210 = vmatprep.mubr.f32.mxu0 0.0
        %1211 = vmatmul.mubr.f32.gmra.mxu0 %v1141
        %v1212 = vpop.f32.mrf.mxu0
        %v1213 = vadd.f32 0.0, %v1212
        %v1214 = vpop.f32.mrf.mxu0
        %v1215 = vadd.f32 0.0, %v1214
        %1216 = vmatprep.mubr.f32.mxu0 0.0
        %1217 = vmatmul.mubr.f32.gmra.mxu0 %v1144
        %v1218 = vpop.f32.mrf.mxu0
        %v1219 = vadd.f32 0.0, %v1218
        %v1220 = vpop.f32.mrf.mxu0
        %v1221 = vadd.f32 0.0, %v1220
        %1222 = vdwg.mxu0
        %v1223 = vmax.f32 %v1213, 0.0
        %v1224 = vmax.f32 %v1215, 0.0
        %v1225 = vmax.f32 %v1219, 0.0
        %v1226 = vmax.f32 %v1221, 0.0
        %v1227 = vmul.f32 %v1223, %v1049
        %v1228 = vmul.f32 %v1224, %v1051
        %v1229 = vmul.f32 %v1225, %v1055
        %v1230 = vmul.f32 %v1226, %v1057
        %v1231 = vxor.u32 %v1229, 2147483648
        %v1232 = vxor.u32 %v1230, 2147483648
        %v1233 = vmul.f32 %v1231, 1.442695
        %v1234 = vpow.pop %v1233
        %v1235 = vmul.f32 %v1232, 1.442695
        %v1236 = vpow.pop %v1235
        %v1237 = vadd.f32 %v1234, 1.0
        %v1238 = vadd.f32 %v1236, 1.0
        %v1239 = vrcp.pop %v1237
        %v1240 = vmul.f32 1.0, %v1239
        %v1241 = vrcp.pop %v1238
        %v1242 = vmul.f32 1.0, %v1241
        %1243 = vst [vmem:[%s228] sm:$0xff] %v1227
        %1244 = vst [vmem:[%s228 + $0x8] sm:$0xff] %v1228
        %1245 = vst [vmem:[%s228 + $0x10] sm:$0xff] %v1240
        %1246 = vst [vmem:[%s228 + $0x18] sm:$0xff] %v1242
        %v1247 = vmul.f32 %v236, %v1240
        %v1248 = vmul.f32 %v237, %v1242
        %v1249 = vsub.f32 1.0, %v1240
        %v1250 = vsub.f32 1.0, %v1242
        %v1251 = vmul.f32 %v1227, %v1249
        %v1252 = vmul.f32 %v1228, %v1250
        %v1253 = vadd.f32 %v1247, %v1251
        %v1254 = vadd.f32 %v1248, %v1252
        %v1255 = vadd.f32 %v1253, %v234
        %v1256 = vadd.f32 %v1254, %v235
        %1258 = vset.pattern.permute.xlu0 0
        %1259 = vperm.xlu0 %1258, %v740
        %v1260 = vpop.permute.xlu0 %1259
        %v1262 = vmul.f32 %v1260, %v1255
        %v1263 = vmul.f32 %v1260, %v1256
        %v1264 = vrot.slane %v1262, 4
        %v1265 = vadd.f32 %v1262, %v1264
        %v1266 = vrot.slane %v1265, 2
        %v1267 = vadd.f32 %v1265, %v1266
        %v1268 = vrot.slane %v1267, 1
        %v1269 = vadd.f32 %v1267, %v1268
        %v1270 = vrot.slane %v1263, 4
        %v1271 = vadd.f32 %v1263, %v1270
        %v1272 = vrot.slane %v1271, 2
        %v1273 = vadd.f32 %v1271, %v1272
        %v1274 = vrot.slane %v1273, 1
        %v1275 = vadd.f32 %v1273, %v1274
        %1277 = vset.pattern.permute.xlu0 0
        %1278 = vperm.xlu0 %1277, %v745
        %v1279 = vpop.permute.xlu0 %1278
        %v1281 = vadd.f32 %v1269, %v1279
        %v1282 = vadd.f32 %v1275, %v1279
        %v1285 = vcombine.low %v1281, %v1282
        %v1287 = vunpack.c.l.s4 1966171168
        %v1288 = vunpack.c.0.s8 %v1287
        %v1289 = vlaneseq
        %v1290 = vshrl.u32 %v1289, 7
        %v1291 = vsub.s32 %v1288, %v1290
        %v1292 = vrot.slane %v1285, %v1291
        %v1294 = vunpack.c.l.s4 1966171168
        %v1295 = vunpack.c.0.s8 %v1294
        %v1296 = vlaneseq
        %v1297 = vshrl.u32 %v1296, 7
        %v1298 = vsub.s32 %v1295, %v1297
        %v1299 = vrot.slane %v1292, %v1298
        %v1301 = vlaneseq
        %vm1302 = vcmp.ge.s32.totalorder %v1301, 0
        %vm1303 = vcmp.lt.s32.totalorder %v1301, 256
        %vm1304 = vmand %vm1302, %vm1303
        %1305 = vst.msk [vmem:[%s221] sm:$0x3] %vm1304, %v1299
        %s1306 = sand.u32 %s120, 1
        %s1307 = scalar_lea.sflag [#allocation4], %s1306
        %s1308 = sand.u32 %s120, 1
        %s1309 = smul.addr %s1308, 2
        %s1310 = scalar_lea.vmem [#allocation3], %s1309
        %s1311 = sand.u32 %s146, 1
        %s1312 = scalar_lea.sflag [#allocation6], %s1311
        %s1313 = sand.u32 %s146, 1
        %s1314 = smul.addr %s1313, 32
        %s1315 = scalar_lea.vmem [#allocation5], %s1314
        // Predicated region
        $region37: #{tpu_custom_call.1} parent=35 // pred_check
          %p1316 = pneg %p130
        $region38: #{tpu_custom_call.1} parent=35 // pred_check_branch
          %1318 = sbr.rel (%p1316) target = $region40
        $region39: #{tpu_custom_call.1} parent=35 // pred_region
          %s1320 = ssub.s32 32, 32
          %1321 = vsyncadd %s1307, %s1320
          %s1322 = smul.addr %s23, 2
          %s1323 = smul.addr %s1322, 16
          %s1324 = scalar_lea.hbm %s4, %s1323
          %s1326 = sshll.u32 %s1310, 4
          %s1327 = int_to_ptr.vmem [resolvable:$true] %s1326
          %1329 = dma.vmem_to_hbm [thread:$0]  %s1327, 32, %s1324, %s1307
        $region40: #{tpu_custom_call.1} parent=35 // pred_fallthru
          _
        // Predicated region
        $region41: #{tpu_custom_call.1} parent=35 // pred_check
          %p1330 = pneg %p156
        $region42: #{tpu_custom_call.1} parent=35 // pred_check_branch
          %1332 = sbr.rel (%p1330) target = $region44
        $region43: #{tpu_custom_call.1} parent=35 // pred_region
          %s1334 = ssub.s32 512, 512
          %1335 = vsyncadd %s1312, %s1334
          %s1336 = smul.addr %s23, 4
          %s1337 = smul.addr %s1336, 128
          %s1338 = scalar_lea.hbm %s5, %s1337
          %s1339 = sshll.u32 %s1315, 4
          %s1340 = int_to_ptr.vmem [resolvable:$true] %s1339
          %1345 = dma.vmem_to_hbm [thread:$0]  %s1340, 512, %s1338, %s1312, 256, 256, 16
        $region44: #{tpu_custom_call.1} parent=35 // pred_fallthru
          _
      $region36: #{tpu_custom_call.1} parent=5 // pred_fallthru
        _
      %p1346 = scmp.le.s32.totalorder 2, %s18
      // Predicated region
      $region45: #{tpu_custom_call.1} parent=5 // pred_check
        %p1347 = pneg %p1346
      $region46: #{tpu_custom_call.1} parent=5 // pred_check_branch
        %1349 = sbr.rel (%p1347) target = $region48
      $region47: #{tpu_custom_call.1} parent=5 // pred_region
        %s1350 = ssub.s32 %s18, 2
        // Predicated region
        $region49: #{tpu_custom_call.1} parent=47 // pred_check
          %p1351 = pneg %p136
        $region50: #{tpu_custom_call.1} parent=47 // pred_check_branch
          %1353 = sbr.rel (%p1351) target = $region52
        $region51: #{tpu_custom_call.1} parent=47 // pred_region
          %s1354 = sand.u32 %s121, 1
          %s1355 = scalar_lea.sflag [#allocation4], %s1354
          %s1356 = sand.u32 %s121, 1
          %s1357 = smul.addr %s1356, 2
          %s1358 = scalar_lea.vmem [#allocation3], %s1357
          %1359 = dma.done %s1355, 32
        $region52: #{tpu_custom_call.1} parent=47 // pred_fallthru
          _
        // Predicated region
        $region53: #{tpu_custom_call.1} parent=47 // pred_check
          %p1360 = pneg %p162
        $region54: #{tpu_custom_call.1} parent=47 // pred_check_branch
          %1362 = sbr.rel (%p1360) target = $region56
        $region55: #{tpu_custom_call.1} parent=47 // pred_region
          %s1363 = sand.u32 %s147, 1
          %s1364 = scalar_lea.sflag [#allocation6], %s1363
          %s1365 = sand.u32 %s147, 1
          %s1366 = smul.addr %s1365, 32
          %s1367 = scalar_lea.vmem [#allocation5], %s1366
          %1368 = dma.done %s1364, 512
        $region56: #{tpu_custom_call.1} parent=47 // pred_fallthru
          _
      $region48: #{tpu_custom_call.1} parent=5 // pred_fallthru
        _
    $region6: #{tpu_custom_call.1} parent=1 // loop_footer
      %s22 = sadd.s32 1, %s18
    $region7: #{tpu_custom_call.1} parent=1 // loop_footer_branch
      %17 = sbr.rel target = $region3
    $region8: #{tpu_custom_call.1} parent=1 // loop_exit
      _
    %1369 = vsyncpa [#allocation4], 1
    %s1370 = scalar_lea.sflag [#allocation4], 1
    %1371 = vsyncpa %s1370, 1
    %1372 = vsyncpa [#allocation6], 1
    %s1373 = scalar_lea.sflag [#allocation6], 1
    %1374 = vsyncpa %s1373, 1

</llo_original>
